<compile_context>
chip_gen: v7x
topology: tpu7x:2x2x1
jax: 0.10.0
libtpu: 0.0.40
codegen_flags: <defaults>
</compile_context>

<pallas_src>
import functools

import jax
import jax.numpy as jnp
import numpy as np
from jax import lax
from jax.experimental import pallas as pl
from jax.experimental.pallas import tpu as pltpu


def _cdiv(a, b):
    return (a + b - 1) // b


def _round_up(a, b):
    return _cdiv(a, b) * b


def mil_kernel(x_ref, w1t_ref, b1_ref, w2_ref, scal_ref, fcwt_ref, fcb_ref,
               out_ref, *, c_valid):
    """One batch block of the MIL forward.

    x_ref   : (Bb, Cp, N) VMEM (bf16/f32) -- Bb batch rows, Cp (padded) channels
    w1t_ref : (N, Nh)     VMEM            -- SelfAttentionPool conv1 weight^T
    b1_ref  : (1, Nh)     VMEM f32
    w2_ref  : (1, Nh)     VMEM f32        -- SelfAttentionPool conv2 weight (row)
    scal_ref: (7,)        SMEM f32        -- [b2, wa0, wa1, wa2, ba, wb, bias2]
    fcwt_ref: (N, 128)    VMEM            -- fc weight^T
    fcb_ref : (1, 128)    VMEM f32
    out_ref : (Bb, 128)   f32
    """
    x = x_ref[...]
    Bb, C, N = x.shape
    padded = C != c_valid
    xf = x.astype(jnp.float32)                       # f32 view of the slab for VPU math
    if padded:
        cmask = lax.broadcasted_iota(jnp.int32, (C, 1), 0) < c_valid      # (C, 1)

    # --- AdaptiveMaxPool1d(1) / AdaptiveAvgPool1d(1) over the channel axis ---
    maxp = jnp.max(jnp.where(cmask, xf, -jnp.inf) if padded else xf, axis=1)   # (Bb, N)
    avgp = jnp.sum(xf, axis=1) * (1.0 / c_valid)                               # (Bb, N)

    # --- SelfAttentionPool(N): 1x1 convs along the channel axis ---
    # Main matmul on the MXU: (Bb*C, N) x (N, Nh); batch*channel rows fill M.
    hT = jnp.dot(x.reshape(Bb * C, N), w1t_ref[...],
                 preferred_element_type=jnp.float32)                           # (Bb*C, Nh)
    hT = jnp.maximum(hT + b1_ref[...], 0.0)
    # Second conv has a single output channel -> VPU multiply + lane reduce
    # (an (Bb*C, Nh) x (Nh, 1) MXU call would yield one useful column).
    aT = jnp.sum(hT * w2_ref[...], axis=-1, keepdims=True) + scal_ref[0]       # (Bb*C, 1)
    a = aT.reshape(Bb, C, 1)                 # free sublane-dim split (C % 8 == 0)
    if padded:
        a = jnp.where(cmask, a, -jnp.inf)

    # Softmax over C on the sublane axis -- no lane relayout, no M=1 matmul.
    m = jnp.max(a, axis=1, keepdims=True)                                      # (Bb, 1, 1)
    e = jnp.exp(a - m)                                                         # (Bb, C, 1)
    attn = e * pl.reciprocal(jnp.sum(e, axis=1, keepdims=True), approx=True)
    # Attention-weighted sum over C: VPU multiply + sublane reduce.
    selfp = jnp.sum(attn * xf, axis=1)                                         # (Bb, N)

    # --- InstanceScore(3): Conv1d(3,1,1) -> tanh -> Conv1d(1,1,1) -> softmax(N)
    wa0, wa1, wa2 = scal_ref[1], scal_ref[2], scal_ref[3]
    ba, wb, bias2 = scal_ref[4], scal_ref[5], scal_ref[6]
    s1 = wa0 * maxp + wa1 * avgp + wa2 * selfp + ba                            # (Bb, N)
    s2 = wb * jnp.tanh(s1) + bias2
    m2 = jnp.max(s2, axis=-1, keepdims=True)
    e2 = jnp.exp(s2 - m2)
    # Exact division here: the score softmax scales the fc output directly and
    # sits off the MXU critical path.
    score = e2 / jnp.sum(e2, axis=-1, keepdims=True)                           # (Bb, N)

    # --- fc: Linear(N, 128); single lane-dense (Bb, 128) store ---
    out = jnp.dot(score.astype(fcwt_ref.dtype), fcwt_ref[...],
                  preferred_element_type=jnp.float32)
    out_ref[...] = out + fcb_ref[...]


def _vmem_capacity_bytes():
    try:
        info = pltpu.get_tpu_info()
        return int(getattr(info, "vmem_capacity_bytes", 64 * 1024 * 1024))
    except Exception:
        return 64 * 1024 * 1024           # conservative fallback (v7x per-TensorCore)


def _pick_batch_block(B, C, per_row_bytes, budget_bytes):
    """Batch rows per grid step.

    Targets (perf review): multiple of 8 (full sublane use on the (Bb, N) slabs);
    Bb*C >= 256 so the (Bb*C, N) matmul fills the MXU rows (128 already suffices
    on v5e); >= 2 (even) grid steps when the batch is big enough so the batch
    axis pipelines and load-balances v7x's two TensorCores; x block plus
    intermediates stay inside the VMEM budget.
    """
    bb_cap = max(8, (budget_bytes // max(per_row_bytes, 1)) // 8 * 8)
    bb_mxu = _round_up(_cdiv(256, max(C, 1)), 8)
    bb = max(8, min(bb_cap, bb_mxu, _round_up(B, 8)))
    if B > bb:
        steps = _round_up(_cdiv(B, bb), 2)                # even step count
        bb = max(8, min(bb, _round_up(_cdiv(B, steps), 8)))
    return bb


def mil_forward(x5d, params, *, compute_dtype=jnp.bfloat16, batch_block=None):
    B, C, H, W, D = x5d.shape
    N = H * W * D
    assert N % 2 == 0, "SelfAttentionPool(N) uses N // 2 hidden channels"
    Nh = N // 2

    compute_dtype = jnp.dtype(compute_dtype)
    xbytes = compute_dtype.itemsize
    c_tile = 16 if xbytes == 2 else 8                 # sublane tile (bf16 / f32)
    Cp = _round_up(C, c_tile)

    # --- parameter plumbing (glue): transposed weights, packed SMEM scalars ---
    w1t = params["sap_w1"].T.astype(compute_dtype)            # (N, Nh)
    b1row = params["sap_b1"].reshape(1, Nh).astype(jnp.float32)
    w2row = params["sap_w2"].reshape(1, Nh).astype(jnp.float32)
    scalars = jnp.stack([
        params["sap_b2"][0],
        params["is_w1"][0, 0], params["is_w1"][0, 1], params["is_w1"][0, 2],
        params["is_b1"][0],
        params["is_w2"][0, 0],
        params["is_b2"][0],
    ]).astype(jnp.float32)                                     # (7,)
    fcwt = params["fc_w"].T.astype(compute_dtype)              # (N, 128)
    fcbrow = params["fc_b"].reshape(1, 128).astype(jnp.float32)

    # --- generation-aware VMEM budget: ~48 MiB on v7x (64 MiB/TC), ~96 MiB on v5e/v6e.
    vmem_cap = _vmem_capacity_bytes() * 3 // 4
    n_lanes = _round_up(N, 128)
    nh_lanes = _round_up(Nh, 128)
    weight_bytes = (_round_up(N, 8) * (nh_lanes + 128) * xbytes   # w1t + fcwt (single-buffered)
                    + 3 * 8 * max(nh_lanes, 128) * 4)             # small f32 rows
    per_row_bytes = (2 * Cp * n_lanes * xbytes     # double-buffered x block
                     + Cp * n_lanes * 4            # f32 transient of the slab
                     + Cp * nh_lanes * 4           # hT
                     + 8 * n_lanes * 4)            # (Bb, N) f32 slabs (pool/score/...)
    budget = max(4 * 1024 * 1024, vmem_cap - weight_bytes - 4 * 1024 * 1024)

    if batch_block is None:
        batch_block = _pick_batch_block(B, Cp, per_row_bytes, budget)
    Bb = int(batch_block)
    assert Bb % 8 == 0
    Bp = _round_up(B, Bb)

    # --- input prep: (B, C, N) in the compute dtype, zero-padded to (Bp, Cp, N) ---
    x = x5d.reshape(B, C, N).astype(compute_dtype)
    if Bp != B or Cp != C:
        x = jnp.pad(x, ((0, Bp - B), (0, Cp - C), (0, 0)))

    kernel = functools.partial(mil_kernel, c_valid=C)

    # NOTE: for very large N (>= ~2048) on v7x, stream w1t in (N, tNh) column
    # chunks over an extra "arbitrary" grid axis (accumulating aT) instead of
    # keeping the full (N, N/2) weight resident.
    def run(single_buffer_weights):
        resident = (dict(pipeline_mode=pl.Buffered(1))
                    if single_buffer_weights else {})
        return pl.pallas_call(
            kernel,
            out_shape=jax.ShapeDtypeStruct((Bp, 128), jnp.float32),
            grid=(Bp // Bb,),
            in_specs=[
                pl.BlockSpec((Bb, Cp, N), lambda i: (i, 0, 0)),
                pl.BlockSpec((N, Nh), lambda i: (0, 0), **resident),
                pl.BlockSpec((1, Nh), lambda i: (0, 0), **resident),
                pl.BlockSpec((1, Nh), lambda i: (0, 0), **resident),
                pl.BlockSpec(memory_space=pltpu.MemorySpace.SMEM),
                pl.BlockSpec((N, 128), lambda i: (0, 0), **resident),
                pl.BlockSpec((1, 128), lambda i: (0, 0), **resident),
            ],
            out_specs=pl.BlockSpec((Bb, 128), lambda i: (i, 0)),
            compiler_params=pltpu.CompilerParams(
                dimension_semantics=("parallel",),
                vmem_limit_bytes=int(vmem_cap),
            ),
        )(x, w1t, b1row, w2row, scalars, fcwt, fcbrow)

    try:
        out = run(True)
    except Exception:
        # Fallback for JAX versions where pl.Buffered(1) is not accepted on
        # pallas_call input specs; only costs extra resident weight VMEM.
        out = run(False)

    return out[:B] if Bp != B else out


def mil_reference(x5d, params):
    """Pure-JAX f32 reference mirroring the PyTorch forward."""
    B, C, H, W, D = x5d.shape
    N = H * W * D
    x = x5d.reshape(B, C, N).transpose(0, 2, 1)          # (B, N, C)
    maxp = x.max(axis=-1)                                # (B, N)
    avgp = x.mean(axis=-1)                               # (B, N)
    h = jax.nn.relu(jnp.einsum("on,bnc->boc", params["sap_w1"], x)
                    + params["sap_b1"][None, :, None])
    a = jnp.einsum("o,boc->bc", params["sap_w2"][0], h) + params["sap_b2"][0]
    attn = jax.nn.softmax(a, axis=-1)                    # (B, C)
    selfp = jnp.einsum("bnc,bc->bn", x, attn)            # (B, N)
    stack = jnp.stack([maxp, avgp, selfp], axis=1)       # (B, 3, N)
    s1 = jnp.einsum("k,bkn->bn", params["is_w1"][0], stack) + params["is_b1"][0]
    s2 = params["is_w2"][0, 0] * jnp.tanh(s1) + params["is_b2"][0]
    score = jax.nn.softmax(s2, axis=-1)                  # (B, N)
    return score @ params["fc_w"].T + params["fc_b"]     # (B, 128)


def init_params(key, num_instances):
    N = num_instances
    Nh = N // 2
    ks = jax.random.split(key, 10)
    f = lambda k, shape: (0.1 * jax.random.normal(k, shape)).astype(jnp.float32)
    return {
        # SelfAttentionPool(N): Conv1d(N, N//2, 1), Conv1d(N//2, 1, 1)
        "sap_w1": f(ks[0], (Nh, N)),
        "sap_b1": f(ks[1], (Nh,)),
        "sap_w2": f(ks[2], (1, Nh)),
        "sap_b2": f(ks[3], (1,)),
        # InstanceScore(3): Conv1d(3, 1, 1), Conv1d(1, 1, 1)
        "is_w1": f(ks[4], (1, 3)),
        "is_b1": f(ks[5], (1,)),
        "is_w2": f(ks[6], (1, 1)),
        "is_b2": f(ks[7], (1,)),
        # fc: Linear(N, 128)
        "fc_w": f(ks[8], (128, N)),
        "fc_b": f(ks[9], (128,)),
    }


if __name__ == "__main__":
    key = jax.random.PRNGKey(0)
    k_x, k_p = jax.random.split(key)

    B, C, H, W, D = 2, 8, 2, 2, 4            # num_instances = H*W*D = 16
    num_instances = H * W * D
    x = jax.random.normal(k_x, (B, C, H, W, D), dtype=jnp.float32)
    params = init_params(k_p, num_instances)

    ref = jax.block_until_ready(mil_reference(x, params))

    # f32 path: tight agreement (only the SAP softmax uses the EUP approx recip).
    out_f32 = jax.block_until_ready(mil_forward(x, params, compute_dtype=jnp.float32))
    assert out_f32.shape == (B, 128)
    np.testing.assert_allclose(np.asarray(out_f32), np.asarray(ref), rtol=2e-3, atol=2e-3)

    # Default bf16 path (performance configuration): looser tolerance inherent to
    # bf16 quantization of x / w1 / fc weights.
    out = jax.block_until_ready(mil_forward(x, params))
    assert out.shape == (B, 128)
    np.testing.assert_allclose(np.asarray(out), np.asarray(ref), rtol=3e-2, atol=3e-2)

    print("KERNEL_OK")
</pallas_src>

<mosaic_0001>
module attributes {stable_mosaic.version = 11 : i64} {
  func.func @mil_kernel(%arg0: i32, %arg1: memref<8x8x16xf32, #tpu.memory_space<vmem>>, %arg2: memref<16x8xf32, #tpu.memory_space<vmem>>, %arg3: memref<1x8xf32, #tpu.memory_space<vmem>>, %arg4: memref<1x8xf32, #tpu.memory_space<vmem>>, %arg5: memref<7xf32, #tpu.memory_space<smem>>, %arg6: memref<16x128xf32, #tpu.memory_space<vmem>>, %arg7: memref<1x128xf32, #tpu.memory_space<vmem>>, %arg8: memref<8x128xf32, #tpu.memory_space<vmem>>) attributes {dimension_semantics = [#tpu.dimension_semantics<parallel>], iteration_bounds = array<i64: 1>, scalar_prefetch = 0 : i64, scratch_operands = 0 : i64, tpu.core_type = #tpu.core_type<tc>, window_params = [{transform_indices = @transform_0, window_bounds = array<i64: 8, 8, 16>}, {pipeline_mode = #tpu.pipeline_mode<synchronous>, transform_indices = @transform_1, window_bounds = array<i64: 16, 8>}, {pipeline_mode = #tpu.pipeline_mode<synchronous>, transform_indices = @transform_2, window_bounds = array<i64: 1, 8>}, {pipeline_mode = #tpu.pipeline_mode<synchronous>, transform_indices = @transform_3, window_bounds = array<i64: 1, 8>}, {transform_indices = @transform_4, window_bounds = array<i64: 7>}, {pipeline_mode = #tpu.pipeline_mode<synchronous>, transform_indices = @transform_5, window_bounds = array<i64: 16, 128>}, {pipeline_mode = #tpu.pipeline_mode<synchronous>, transform_indices = @transform_6, window_bounds = array<i64: 1, 128>}, {transform_indices = @transform_7, window_bounds = array<i64: 8, 128>}]} {
    %c0 = arith.constant 0 : index
    %c0_0 = arith.constant 0 : index
    %c0_1 = arith.constant 0 : index
    %0 = vector.load %arg1[%c0, %c0_0, %c0_1] : memref<8x8x16xf32, #tpu.memory_space<vmem>>, vector<8x8x16xf32>
    %cst = arith.constant dense<0xFF800000> : vector<8x16xf32>
    %1 = vector.multi_reduction <maximumf>, %0, %cst [1] : vector<8x8x16xf32> to vector<8x16xf32>
    %cst_2 = arith.constant dense<0.000000e+00> : vector<8x16xf32>
    %2 = vector.multi_reduction <add>, %0, %cst_2 [1] : vector<8x8x16xf32> to vector<8x16xf32>
    %cst_3 = arith.constant 1.250000e-01 : f32
    %3 = vector.broadcast %cst_3 : f32 to vector<8x16xf32>
    %4 = arith.mulf %2, %3 : vector<8x16xf32>
    %5 = vector.shape_cast %0 : vector<8x8x16xf32> to vector<64x16xf32>
    %c0_4 = arith.constant 0 : index
    %c0_5 = arith.constant 0 : index
    %6 = vector.load %arg2[%c0_4, %c0_5] : memref<16x8xf32, #tpu.memory_space<vmem>>, vector<16x8xf32>
    %cst_6 = arith.constant dense<0.000000e+00> : vector<64x8xf32>
    %7 = tpu.matmul %5, %6, %cst_6 {dimension_numbers = #tpu.dot_dimension_numbers<[1], [0], [0], [1], [0, 0, 1, 1], [], []>} : vector<64x16xf32>, vector<16x8xf32>, vector<64x8xf32> -> vector<64x8xf32>
    %c0_7 = arith.constant 0 : index
    %c0_8 = arith.constant 0 : index
    %8 = vector.load %arg3[%c0_7, %c0_8] : memref<1x8xf32, #tpu.memory_space<vmem>>, vector<1x8xf32>
    %9 = vector.broadcast %8 : vector<1x8xf32> to vector<64x8xf32>
    %10 = arith.addf %7, %9 : vector<64x8xf32>
    %cst_9 = arith.constant 0.000000e+00 : f32
    %11 = vector.broadcast %cst_9 : f32 to vector<64x8xf32>
    %12 = arith.maximumf %10, %11 : vector<64x8xf32>
    %c0_10 = arith.constant 0 : index
    %c0_11 = arith.constant 0 : index
    %13 = vector.load %arg4[%c0_10, %c0_11] : memref<1x8xf32, #tpu.memory_space<vmem>>, vector<1x8xf32>
    %14 = vector.broadcast %13 : vector<1x8xf32> to vector<64x8xf32>
    %15 = arith.mulf %12, %14 : vector<64x8xf32>
    %cst_12 = arith.constant dense<0.000000e+00> : vector<64xf32>
    %16 = vector.multi_reduction <add>, %15, %cst_12 [1] : vector<64x8xf32> to vector<64xf32>
    %17 = vector.shape_cast %16 : vector<64xf32> to vector<64x1xf32>
    %c0_13 = arith.constant 0 : index
    %18 = memref.load %arg5[%c0_13] : memref<7xf32, #tpu.memory_space<smem>>
    %19 = vector.broadcast %18 : f32 to vector<64x1xf32>
    %20 = arith.addf %17, %19 : vector<64x1xf32>
    %21 = vector.shape_cast %20 : vector<64x1xf32> to vector<8x8x1xf32>
    %cst_14 = arith.constant dense<0xFF800000> : vector<8x1xf32>
    %22 = vector.multi_reduction <maximumf>, %21, %cst_14 [1] : vector<8x8x1xf32> to vector<8x1xf32>
    %23 = vector.shape_cast %22 : vector<8x1xf32> to vector<8x1x1xf32>
    %24 = vector.broadcast %23 : vector<8x1x1xf32> to vector<8x8x1xf32>
    %25 = arith.subf %21, %24 : vector<8x8x1xf32>
    %26 = math.exp %25 : vector<8x8x1xf32>
    %cst_15 = arith.constant dense<0.000000e+00> : vector<8x1xf32>
    %27 = vector.multi_reduction <add>, %26, %cst_15 [1] : vector<8x8x1xf32> to vector<8x1xf32>
    %28 = vector.shape_cast %27 : vector<8x1xf32> to vector<8x1x1xf32>
    %29 = tpu.reciprocal %28 {approx = true} : vector<8x1x1xf32> -> vector<8x1x1xf32>
    %30 = vector.broadcast %29 : vector<8x1x1xf32> to vector<8x8x1xf32>
    %31 = arith.mulf %26, %30 : vector<8x8x1xf32>
    %32 = vector.broadcast %31 : vector<8x8x1xf32> to vector<8x8x16xf32>
    %33 = arith.mulf %32, %0 : vector<8x8x16xf32>
    %cst_16 = arith.constant dense<0.000000e+00> : vector<8x16xf32>
    %34 = vector.multi_reduction <add>, %33, %cst_16 [1] : vector<8x8x16xf32> to vector<8x16xf32>
    %c1 = arith.constant 1 : index
    %35 = memref.load %arg5[%c1] : memref<7xf32, #tpu.memory_space<smem>>
    %c2 = arith.constant 2 : index
    %36 = memref.load %arg5[%c2] : memref<7xf32, #tpu.memory_space<smem>>
    %c3 = arith.constant 3 : index
    %37 = memref.load %arg5[%c3] : memref<7xf32, #tpu.memory_space<smem>>
    %c4 = arith.constant 4 : index
    %38 = memref.load %arg5[%c4] : memref<7xf32, #tpu.memory_space<smem>>
    %c5 = arith.constant 5 : index
    %39 = memref.load %arg5[%c5] : memref<7xf32, #tpu.memory_space<smem>>
    %c6 = arith.constant 6 : index
    %40 = memref.load %arg5[%c6] : memref<7xf32, #tpu.memory_space<smem>>
    %41 = vector.broadcast %35 : f32 to vector<8x16xf32>
    %42 = arith.mulf %41, %1 : vector<8x16xf32>
    %43 = vector.broadcast %36 : f32 to vector<8x16xf32>
    %44 = arith.mulf %43, %4 : vector<8x16xf32>
    %45 = arith.addf %42, %44 : vector<8x16xf32>
    %46 = vector.broadcast %37 : f32 to vector<8x16xf32>
    %47 = arith.mulf %46, %34 : vector<8x16xf32>
    %48 = arith.addf %45, %47 : vector<8x16xf32>
    %49 = vector.broadcast %38 : f32 to vector<8x16xf32>
    %50 = arith.addf %48, %49 : vector<8x16xf32>
    %51 = math.tanh %50 : vector<8x16xf32>
    %52 = vector.broadcast %39 : f32 to vector<8x16xf32>
    %53 = arith.mulf %52, %51 : vector<8x16xf32>
    %54 = vector.broadcast %40 : f32 to vector<8x16xf32>
    %55 = arith.addf %53, %54 : vector<8x16xf32>
    %cst_17 = arith.constant dense<0xFF800000> : vector<8xf32>
    %56 = vector.multi_reduction <maximumf>, %55, %cst_17 [1] : vector<8x16xf32> to vector<8xf32>
    %57 = vector.shape_cast %56 : vector<8xf32> to vector<8x1xf32>
    %58 = vector.broadcast %57 : vector<8x1xf32> to vector<8x16xf32>
    %59 = arith.subf %55, %58 : vector<8x16xf32>
    %60 = math.exp %59 : vector<8x16xf32>
    %cst_18 = arith.constant dense<0.000000e+00> : vector<8xf32>
    %61 = vector.multi_reduction <add>, %60, %cst_18 [1] : vector<8x16xf32> to vector<8xf32>
    %62 = vector.shape_cast %61 : vector<8xf32> to vector<8x1xf32>
    %63 = vector.broadcast %62 : vector<8x1xf32> to vector<8x16xf32>
    %64 = arith.divf %60, %63 : vector<8x16xf32>
    %c0_19 = arith.constant 0 : index
    %c0_20 = arith.constant 0 : index
    %65 = vector.load %arg6[%c0_19, %c0_20] : memref<16x128xf32, #tpu.memory_space<vmem>>, vector<16x128xf32>
    %cst_21 = arith.constant dense<0.000000e+00> : vector<8x128xf32>
    %66 = tpu.matmul %64, %65, %cst_21 {dimension_numbers = #tpu.dot_dimension_numbers<[1], [0], [0], [1], [0, 0, 1, 1], [], []>} : vector<8x16xf32>, vector<16x128xf32>, vector<8x128xf32> -> vector<8x128xf32>
    %c0_22 = arith.constant 0 : index
    %c0_23 = arith.constant 0 : index
    %67 = vector.load %arg7[%c0_22, %c0_23] : memref<1x128xf32, #tpu.memory_space<vmem>>, vector<1x128xf32>
    %68 = vector.broadcast %67 : vector<1x128xf32> to vector<8x128xf32>
    %69 = arith.addf %66, %68 : vector<8x128xf32>
    %c0_24 = arith.constant 0 : index
    %c0_25 = arith.constant 0 : index
    %70 = vector.load %arg8[%c0_24, %c0_25] : memref<8x128xf32, #tpu.memory_space<vmem>>, vector<8x128xf32>
    tpu.vector_store %arg8[%c0_24, %c0_25], %69 {strides = array<i32>} : memref<8x128xf32, #tpu.memory_space<vmem>>, vector<8x128xf32>,
    return
  }
  func.func @transform_0(%arg0: i32) -> (i32, i32, i32) {
    %c0_i32 = arith.constant 0 : i32
    %c0_i32_0 = arith.constant 0 : i32
    %c0_i32_1 = arith.constant 0 : i32
    return %arg0, %c0_i32, %c0_i32_0 : i32, i32, i32
  }
  func.func @transform_1(%arg0: i32) -> (i32, i32) {
    %c0_i32 = arith.constant 0 : i32
    %c0_i32_0 = arith.constant 0 : i32
    %c0_i32_1 = arith.constant 0 : i32
    return %c0_i32, %c0_i32_0 : i32, i32
  }
  func.func @transform_2(%arg0: i32) -> (i32, i32) {
    %c0_i32 = arith.constant 0 : i32
    %c0_i32_0 = arith.constant 0 : i32
    %c0_i32_1 = arith.constant 0 : i32
    return %c0_i32, %c0_i32_0 : i32, i32
  }
  func.func @transform_3(%arg0: i32) -> (i32, i32) {
    %c0_i32 = arith.constant 0 : i32
    %c0_i32_0 = arith.constant 0 : i32
    %c0_i32_1 = arith.constant 0 : i32
    return %c0_i32, %c0_i32_0 : i32, i32
  }
  func.func @transform_4(%arg0: i32) -> i32 {
    %c0_i32 = arith.constant 0 : i32
    %c0_i32_0 = arith.constant 0 : i32
    return %c0_i32 : i32
  }
  func.func @transform_5(%arg0: i32) -> (i32, i32) {
    %c0_i32 = arith.constant 0 : i32
    %c0_i32_0 = arith.constant 0 : i32
    %c0_i32_1 = arith.constant 0 : i32
    return %c0_i32, %c0_i32_0 : i32, i32
  }
  func.func @transform_6(%arg0: i32) -> (i32, i32) {
    %c0_i32 = arith.constant 0 : i32
    %c0_i32_0 = arith.constant 0 : i32
    %c0_i32_1 = arith.constant 0 : i32
    return %c0_i32, %c0_i32_0 : i32, i32
  }
  func.func @transform_7(%arg0: i32) -> (i32, i32) {
    %c0_i32 = arith.constant 0 : i32
    %c0_i32_0 = arith.constant 0 : i32
    return %arg0, %c0_i32 : i32, i32
  }
}

module attributes {stable_mosaic.version = 11 : i64} {
  func.func @mil_kernel(%arg0: i32, %arg1: memref<8x8x16xf32, #tpu.memory_space<vmem>>, %arg2: memref<16x8xf32, #tpu.memory_space<vmem>>, %arg3: memref<1x8xf32, #tpu.memory_space<vmem>>, %arg4: memref<1x8xf32, #tpu.memory_space<vmem>>, %arg5: memref<7xf32, #tpu.memory_space<smem>>, %arg6: memref<16x128xf32, #tpu.memory_space<vmem>>, %arg7: memref<1x128xf32, #tpu.memory_space<vmem>>, %arg8: memref<8x128xf32, #tpu.memory_space<vmem>>) attributes {dimension_semantics = [#tpu.dimension_semantics<parallel>], iteration_bounds = array<i64: 1>, scalar_prefetch = 0 : i64, scratch_operands = 0 : i64, tpu.core_type = #tpu.core_type<tc>, window_params = [{transform_indices = @transform_0, window_bounds = array<i64: 8, 8, 16>}, {pipeline_mode = #tpu.pipeline_mode<synchronous>, transform_indices = @transform_1, window_bounds = array<i64: 16, 8>}, {pipeline_mode = #tpu.pipeline_mode<synchronous>, transform_indices = @transform_2, window_bounds = array<i64: 1, 8>}, {pipeline_mode = #tpu.pipeline_mode<synchronous>, transform_indices = @transform_3, window_bounds = array<i64: 1, 8>}, {transform_indices = @transform_4, window_bounds = array<i64: 7>}, {pipeline_mode = #tpu.pipeline_mode<synchronous>, transform_indices = @transform_5, window_bounds = array<i64: 16, 128>}, {pipeline_mode = #tpu.pipeline_mode<synchronous>, transform_indices = @transform_6, window_bounds = array<i64: 1, 128>}, {transform_indices = @transform_7, window_bounds = array<i64: 8, 128>}]} {
    %c0 = arith.constant 0 : index
    %c0_0 = arith.constant 0 : index
    %c0_1 = arith.constant 0 : index
    %0 = vector.load %arg1[%c0, %c0_0, %c0_1] : memref<8x8x16xf32, #tpu.memory_space<vmem>>, vector<8x8x16xf32>
    %cst = arith.constant dense<0xFF800000> : vector<8x16xf32>
    %1 = vector.multi_reduction <maximumf>, %0, %cst [1] : vector<8x8x16xf32> to vector<8x16xf32>
    %cst_2 = arith.constant dense<0.000000e+00> : vector<8x16xf32>
    %2 = vector.multi_reduction <add>, %0, %cst_2 [1] : vector<8x8x16xf32> to vector<8x16xf32>
    %cst_3 = arith.constant 1.250000e-01 : f32
    %3 = vector.broadcast %cst_3 : f32 to vector<8x16xf32>
    %4 = arith.mulf %2, %3 : vector<8x16xf32>
    %5 = vector.shape_cast %0 : vector<8x8x16xf32> to vector<64x16xf32>
    %c0_4 = arith.constant 0 : index
    %c0_5 = arith.constant 0 : index
    %6 = vector.load %arg2[%c0_4, %c0_5] : memref<16x8xf32, #tpu.memory_space<vmem>>, vector<16x8xf32>
    %cst_6 = arith.constant dense<0.000000e+00> : vector<64x8xf32>
    %7 = tpu.matmul %5, %6, %cst_6 {dimension_numbers = #tpu.dot_dimension_numbers<[1], [0], [0], [1], [0, 0, 1, 1], [], []>} : vector<64x16xf32>, vector<16x8xf32>, vector<64x8xf32> -> vector<64x8xf32>
    %c0_7 = arith.constant 0 : index
    %c0_8 = arith.constant 0 : index
    %8 = vector.load %arg3[%c0_7, %c0_8] : memref<1x8xf32, #tpu.memory_space<vmem>>, vector<1x8xf32>
    %9 = vector.broadcast %8 : vector<1x8xf32> to vector<64x8xf32>
    %10 = arith.addf %7, %9 : vector<64x8xf32>
    %cst_9 = arith.constant 0.000000e+00 : f32
    %11 = vector.broadcast %cst_9 : f32 to vector<64x8xf32>
    %12 = arith.maximumf %10, %11 : vector<64x8xf32>
    %c0_10 = arith.constant 0 : index
    %c0_11 = arith.constant 0 : index
    %13 = vector.load %arg4[%c0_10, %c0_11] : memref<1x8xf32, #tpu.memory_space<vmem>>, vector<1x8xf32>
    %14 = vector.broadcast %13 : vector<1x8xf32> to vector<64x8xf32>
    %15 = arith.mulf %12, %14 : vector<64x8xf32>
    %cst_12 = arith.constant dense<0.000000e+00> : vector<64xf32>
    %16 = vector.multi_reduction <add>, %15, %cst_12 [1] : vector<64x8xf32> to vector<64xf32>
    %17 = vector.shape_cast %16 : vector<64xf32> to vector<64x1xf32>
    %c0_13 = arith.constant 0 : index
    %18 = memref.load %arg5[%c0_13] : memref<7xf32, #tpu.memory_space<smem>>
    %19 = vector.broadcast %18 : f32 to vector<64x1xf32>
    %20 = arith.addf %17, %19 : vector<64x1xf32>
    %21 = vector.shape_cast %20 : vector<64x1xf32> to vector<8x8x1xf32>
    %cst_14 = arith.constant dense<0xFF800000> : vector<8x1xf32>
    %22 = vector.multi_reduction <maximumf>, %21, %cst_14 [1] : vector<8x8x1xf32> to vector<8x1xf32>
    %23 = vector.shape_cast %22 : vector<8x1xf32> to vector<8x1x1xf32>
    %24 = vector.broadcast %23 : vector<8x1x1xf32> to vector<8x8x1xf32>
    %25 = arith.subf %21, %24 : vector<8x8x1xf32>
    %26 = math.exp %25 : vector<8x8x1xf32>
    %cst_15 = arith.constant dense<0.000000e+00> : vector<8x1xf32>
    %27 = vector.multi_reduction <add>, %26, %cst_15 [1] : vector<8x8x1xf32> to vector<8x1xf32>
    %28 = vector.shape_cast %27 : vector<8x1xf32> to vector<8x1x1xf32>
    %29 = tpu.reciprocal %28 {approx = true} : vector<8x1x1xf32> -> vector<8x1x1xf32>
    %30 = vector.broadcast %29 : vector<8x1x1xf32> to vector<8x8x1xf32>
    %31 = arith.mulf %26, %30 : vector<8x8x1xf32>
    %32 = vector.broadcast %31 : vector<8x8x1xf32> to vector<8x8x16xf32>
    %33 = arith.mulf %32, %0 : vector<8x8x16xf32>
    %cst_16 = arith.constant dense<0.000000e+00> : vector<8x16xf32>
    %34 = vector.multi_reduction <add>, %33, %cst_16 [1] : vector<8x8x16xf32> to vector<8x16xf32>
    %c1 = arith.constant 1 : index
    %35 = memref.load %arg5[%c1] : memref<7xf32, #tpu.memory_space<smem>>
    %c2 = arith.constant 2 : index
    %36 = memref.load %arg5[%c2] : memref<7xf32, #tpu.memory_space<smem>>
    %c3 = arith.constant 3 : index
    %37 = memref.load %arg5[%c3] : memref<7xf32, #tpu.memory_space<smem>>
    %c4 = arith.constant 4 : index
    %38 = memref.load %arg5[%c4] : memref<7xf32, #tpu.memory_space<smem>>
    %c5 = arith.constant 5 : index
    %39 = memref.load %arg5[%c5] : memref<7xf32, #tpu.memory_space<smem>>
    %c6 = arith.constant 6 : index
    %40 = memref.load %arg5[%c6] : memref<7xf32, #tpu.memory_space<smem>>
    %41 = vector.broadcast %35 : f32 to vector<8x16xf32>
    %42 = arith.mulf %41, %1 : vector<8x16xf32>
    %43 = vector.broadcast %36 : f32 to vector<8x16xf32>
    %44 = arith.mulf %43, %4 : vector<8x16xf32>
    %45 = arith.addf %42, %44 : vector<8x16xf32>
    %46 = vector.broadcast %37 : f32 to vector<8x16xf32>
    %47 = arith.mulf %46, %34 : vector<8x16xf32>
    %48 = arith.addf %45, %47 : vector<8x16xf32>
    %49 = vector.broadcast %38 : f32 to vector<8x16xf32>
    %50 = arith.addf %48, %49 : vector<8x16xf32>
    %51 = math.tanh %50 : vector<8x16xf32>
    %52 = vector.broadcast %39 : f32 to vector<8x16xf32>
    %53 = arith.mulf %52, %51 : vector<8x16xf32>
    %54 = vector.broadcast %40 : f32 to vector<8x16xf32>
    %55 = arith.addf %53, %54 : vector<8x16xf32>
    %cst_17 = arith.constant dense<0xFF800000> : vector<8xf32>
    %56 = vector.multi_reduction <maximumf>, %55, %cst_17 [1] : vector<8x16xf32> to vector<8xf32>
    %57 = vector.shape_cast %56 : vector<8xf32> to vector<8x1xf32>
    %58 = vector.broadcast %57 : vector<8x1xf32> to vector<8x16xf32>
    %59 = arith.subf %55, %58 : vector<8x16xf32>
    %60 = math.exp %59 : vector<8x16xf32>
    %cst_18 = arith.constant dense<0.000000e+00> : vector<8xf32>
    %61 = vector.multi_reduction <add>, %60, %cst_18 [1] : vector<8x16xf32> to vector<8xf32>
    %62 = vector.shape_cast %61 : vector<8xf32> to vector<8x1xf32>
    %63 = vector.broadcast %62 : vector<8x1xf32> to vector<8x16xf32>
    %64 = arith.divf %60, %63 : vector<8x16xf32>
    %c0_19 = arith.constant 0 : index
    %c0_20 = arith.constant 0 : index
    %65 = vector.load %arg6[%c0_19, %c0_20] : memref<16x128xf32, #tpu.memory_space<vmem>>, vector<16x128xf32>
    %cst_21 = arith.constant dense<0.000000e+00> : vector<8x128xf32>
    %66 = tpu.matmul %64, %65, %cst_21 {dimension_numbers = #tpu.dot_dimension_numbers<[1], [0], [0], [1], [0, 0, 1, 1], [], []>} : vector<8x16xf32>, vector<16x128xf32>, vector<8x128xf32> -> vector<8x128xf32>
    %c0_22 = arith.constant 0 : index
    %c0_23 = arith.constant 0 : index
    %67 = vector.load %arg7[%c0_22, %c0_23] : memref<1x128xf32, #tpu.memory_space<vmem>>, vector<1x128xf32>
    %68 = vector.broadcast %67 : vector<1x128xf32> to vector<8x128xf32>
    %69 = arith.addf %66, %68 : vector<8x128xf32>
    %c0_24 = arith.constant 0 : index
    %c0_25 = arith.constant 0 : index
    %70 = vector.load %arg8[%c0_24, %c0_25] : memref<8x128xf32, #tpu.memory_space<vmem>>, vector<8x128xf32>
    tpu.vector_store %arg8[%c0_24, %c0_25], %69 {strides = array<i32>} : memref<8x128xf32, #tpu.memory_space<vmem>>, vector<8x128xf32>,
    return
  }
  func.func @transform_0(%arg0: i32) -> (i32, i32, i32) {
    %c0_i32 = arith.constant 0 : i32
    %c0_i32_0 = arith.constant 0 : i32
    %c0_i32_1 = arith.constant 0 : i32
    return %arg0, %c0_i32, %c0_i32_0 : i32, i32, i32
  }
  func.func @transform_1(%arg0: i32) -> (i32, i32) {
    %c0_i32 = arith.constant 0 : i32
    %c0_i32_0 = arith.constant 0 : i32
    %c0_i32_1 = arith.constant 0 : i32
    return %c0_i32, %c0_i32_0 : i32, i32
  }
  func.func @transform_2(%arg0: i32) -> (i32, i32) {
    %c0_i32 = arith.constant 0 : i32
    %c0_i32_0 = arith.constant 0 : i32
    %c0_i32_1 = arith.constant 0 : i32
    return %c0_i32, %c0_i32_0 : i32, i32
  }
  func.func @transform_3(%arg0: i32) -> (i32, i32) {
    %c0_i32 = arith.constant 0 : i32
    %c0_i32_0 = arith.constant 0 : i32
    %c0_i32_1 = arith.constant 0 : i32
    return %c0_i32, %c0_i32_0 : i32, i32
  }
  func.func @transform_4(%arg0: i32) -> i32 {
    %c0_i32 = arith.constant 0 : i32
    %c0_i32_0 = arith.constant 0 : i32
    return %c0_i32 : i32
  }
  func.func @transform_5(%arg0: i32) -> (i32, i32) {
    %c0_i32 = arith.constant 0 : i32
    %c0_i32_0 = arith.constant 0 : i32
    %c0_i32_1 = arith.constant 0 : i32
    return %c0_i32, %c0_i32_0 : i32, i32
  }
  func.func @transform_6(%arg0: i32) -> (i32, i32) {
    %c0_i32 = arith.constant 0 : i32
    %c0_i32_0 = arith.constant 0 : i32
    %c0_i32_1 = arith.constant 0 : i32
    return %c0_i32, %c0_i32_0 : i32, i32
  }
  func.func @transform_7(%arg0: i32) -> (i32, i32) {
    %c0_i32 = arith.constant 0 : i32
    %c0_i32_0 = arith.constant 0 : i32
    return %arg0, %c0_i32 : i32, i32
  }
}

</mosaic_0001>

<llo_original>
// kernel: tpu_custom_call.1
$region0: #{tpu_custom_call.1}
  #allocation0 [shape = 'u32[]', space=smem, size = 0x4, offset = 0x4, fixed_abs, tag = 'smem constant byte address 0x4 - core index']
  #allocation1 [shape = 'u32[144,128]{1,0:T(1,128)}', space=vmem, size = 0x12000, scoped, tag = 'internal scratch']
  %s0 = inlined_call_operand.hbm [shape: f32[8,8,16], index: 0, kind: input, shape index: {}]
  %s1 = inlined_call_operand.vmem [shape: f32[16,8], index: 1, kind: input, shape index: {}]
  %s2 = inlined_call_operand.vmem [shape: f32[1,8], index: 2, kind: input, shape index: {}]
  %s3 = inlined_call_operand.vmem [shape: f32[1,8], index: 3, kind: input, shape index: {}]
  %s4 = inlined_call_operand.vmem [shape: f32[7], index: 4, kind: input, shape index: {}]
  %s5 = inlined_call_operand.vmem [shape: f32[16,128], index: 5, kind: input, shape index: {}]
  %s6 = inlined_call_operand.vmem [shape: f32[1,128], index: 6, kind: input, shape index: {}]
  %s7 = inlined_call_operand.hbm [shape: f32[8,128], index: 7, kind: output, shape index: {}]
  %s8 = sld [smem:[#allocation0]]
  $region46: #{tpu_custom_call.1} parent=0
    _
  %s10 = ssub.s32 1, %s8
  %s11 = scalar_select 0, %s10, %s8
  $region1: #{tpu_custom_call.1} parent=0
    #allocation2 [shape = 'u8[32768]{0}', space=vmem, size = 0x8000, scoped, tag = 'input window, operand 0, single buffered']
    #allocation3 [shape = 's32[1]{0}', space=sflag, size = 0x4, scoped, tag = 'scoped memory for tpu_custom_call.1']
    #allocation4 [shape = 's32[1]{0}', space=sflag, size = 0x4, scoped, tag = 'scoped memory for tpu_custom_call.1']
    #allocation5 [shape = 's32[1]{0}', space=sflag, size = 0x4, scoped, tag = 'scoped memory for tpu_custom_call.1']
    #allocation6 [shape = 'u8[512]{0}', space=smem, size = 0x200, scoped, tag = 'input window, operand 4, single buffered']
    #allocation7 [shape = 'u8[4096]{0}', space=vmem, size = 0x1000, scoped, tag = 'output window, operand 0, single buffered']
    %12 = vsyncpa [#allocation3], 0
    %13 = vsyncpa [#allocation5], 0
    %14 = vsyncpa [#allocation4], 0
    // Predicated region
    $region2: #{tpu_custom_call.1} parent=1 // pred_check
      _
    $region3: #{tpu_custom_call.1} parent=1 // pred_check_branch
      %16 = sbr.rel (0) target = $region5
    $region4: #{tpu_custom_call.1} parent=1 // pred_region
      %s18 = ssub.s32 1024, 1024
      %19 = vsyncadd [#allocation3], %s18
      %s20 = sshll.u32 [#allocation2], 4
      %s21 = int_to_ptr.vmem [resolvable:$true] %s20
      %26 = dma.hbm_to_vmem [thread:$0]  %s0, 1024, %s21, [#allocation3], 128, 128, 8
    $region5: #{tpu_custom_call.1} parent=1 // pred_fallthru
      _
    // Predicated region
    $region6: #{tpu_custom_call.1} parent=1 // pred_check
      _
    $region7: #{tpu_custom_call.1} parent=1 // pred_check_branch
      %28 = sbr.rel (0) target = $region9
    $region8: #{tpu_custom_call.1} parent=1 // pred_region
      _
    $region9: #{tpu_custom_call.1} parent=1 // pred_fallthru
      _
    // Predicated region
    $region10: #{tpu_custom_call.1} parent=1 // pred_check
      _
    $region11: #{tpu_custom_call.1} parent=1 // pred_check_branch
      %30 = sbr.rel (0) target = $region13
    $region12: #{tpu_custom_call.1} parent=1 // pred_region
      _
    $region13: #{tpu_custom_call.1} parent=1 // pred_fallthru
      _
    // Predicated region
    $region14: #{tpu_custom_call.1} parent=1 // pred_check
      _
    $region15: #{tpu_custom_call.1} parent=1 // pred_check_branch
      %32 = sbr.rel (0) target = $region17
    $region16: #{tpu_custom_call.1} parent=1 // pred_region
      _
    $region17: #{tpu_custom_call.1} parent=1 // pred_fallthru
      _
    // Predicated region
    $region18: #{tpu_custom_call.1} parent=1 // pred_check
      _
    $region19: #{tpu_custom_call.1} parent=1 // pred_check_branch
      %34 = sbr.rel (0) target = $region21
    $region20: #{tpu_custom_call.1} parent=1 // pred_region
      %s36 = ssub.s32 16, 16
      %37 = vsyncadd [#allocation5], %s36
      %s39 = sshll.u32 %s4, 4
      %s40 = int_to_ptr.vmem [resolvable:$true] %s39
      %42 = dma.vmem_to_smem %s40, 16, [#allocation6], [#allocation5]
    $region21: #{tpu_custom_call.1} parent=1 // pred_fallthru
      _
    // Predicated region
    $region22: #{tpu_custom_call.1} parent=1 // pred_check
      _
    $region23: #{tpu_custom_call.1} parent=1 // pred_check_branch
      %44 = sbr.rel (0) target = $region25
    $region24: #{tpu_custom_call.1} parent=1 // pred_region
      _
    $region25: #{tpu_custom_call.1} parent=1 // pred_fallthru
      _
    // Predicated region
    $region26: #{tpu_custom_call.1} parent=1 // pred_check
      _
    $region27: #{tpu_custom_call.1} parent=1 // pred_check_branch
      %46 = sbr.rel (0) target = $region29
    $region28: #{tpu_custom_call.1} parent=1 // pred_region
      _
    $region29: #{tpu_custom_call.1} parent=1 // pred_fallthru
      _
    // Predicated region
    $region30: #{tpu_custom_call.1} parent=1 // pred_check
      _
    $region31: #{tpu_custom_call.1} parent=1 // pred_check_branch
      %48 = sbr.rel (0) target = $region33
    $region32: #{tpu_custom_call.1} parent=1 // pred_region
      %49 = dma.done [#allocation3], 1024
    $region33: #{tpu_custom_call.1} parent=1 // pred_fallthru
      _
    // Predicated region
    $region34: #{tpu_custom_call.1} parent=1 // pred_check
      _
    $region35: #{tpu_custom_call.1} parent=1 // pred_check_branch
      %51 = sbr.rel (0) target = $region37
    $region36: #{tpu_custom_call.1} parent=1 // pred_region
      %52 = dma.done [#allocation5], 16
    $region37: #{tpu_custom_call.1} parent=1 // pred_fallthru
      _
    %53 = sfence
    %v54 = vld [vmem:[#allocation2] sm:$0xff]
    %v55 = vld [vmem:[#allocation2 + $0x8] sm:$0xff]
    %v56 = vld [vmem:[#allocation2 + $0x10] sm:$0xff]
    %v57 = vld [vmem:[#allocation2 + $0x18] sm:$0xff]
    %v58 = vld [vmem:[#allocation2 + $0x20] sm:$0xff]
    %v59 = vld [vmem:[#allocation2 + $0x28] sm:$0xff]
    %v60 = vld [vmem:[#allocation2 + $0x30] sm:$0xff]
    %v61 = vld [vmem:[#allocation2 + $0x38] sm:$0xff]
    %vm62 = vcmask 130048
    %v63 = vsel %vm62, %v54, -inf
    %v64 = vrot.slane %v63, 4
    %v65 = vmax.f32 %v63, %v64
    %v66 = vrot.slane %v65, 2
    %v67 = vmax.f32 %v65, %v66
    %v68 = vrot.slane %v67, 1
    %v69 = vmax.f32 %v67, %v68
    %v70 = vsel %vm62, %v55, -inf
    %v71 = vrot.slane %v70, 4
    %v72 = vmax.f32 %v70, %v71
    %v73 = vrot.slane %v72, 2
    %v74 = vmax.f32 %v72, %v73
    %v75 = vrot.slane %v74, 1
    %v76 = vmax.f32 %v74, %v75
    %v77 = vsel %vm62, %v56, -inf
    %v78 = vrot.slane %v77, 4
    %v79 = vmax.f32 %v77, %v78
    %v80 = vrot.slane %v79, 2
    %v81 = vmax.f32 %v79, %v80
    %v82 = vrot.slane %v81, 1
    %v83 = vmax.f32 %v81, %v82
    %v84 = vsel %vm62, %v57, -inf
    %v85 = vrot.slane %v84, 4
    %v86 = vmax.f32 %v84, %v85
    %v87 = vrot.slane %v86, 2
    %v88 = vmax.f32 %v86, %v87
    %v89 = vrot.slane %v88, 1
    %v90 = vmax.f32 %v88, %v89
    %v91 = vsel %vm62, %v58, -inf
    %v92 = vrot.slane %v91, 4
    %v93 = vmax.f32 %v91, %v92
    %v94 = vrot.slane %v93, 2
    %v95 = vmax.f32 %v93, %v94
    %v96 = vrot.slane %v95, 1
    %v97 = vmax.f32 %v95, %v96
    %v98 = vsel %vm62, %v59, -inf
    %v99 = vrot.slane %v98, 4
    %v100 = vmax.f32 %v98, %v99
    %v101 = vrot.slane %v100, 2
    %v102 = vmax.f32 %v100, %v101
    %v103 = vrot.slane %v102, 1
    %v104 = vmax.f32 %v102, %v103
    %v105 = vsel %vm62, %v60, -inf
    %v106 = vrot.slane %v105, 4
    %v107 = vmax.f32 %v105, %v106
    %v108 = vrot.slane %v107, 2
    %v109 = vmax.f32 %v107, %v108
    %v110 = vrot.slane %v109, 1
    %v111 = vmax.f32 %v109, %v110
    %v112 = vsel %vm62, %v61, -inf
    %v113 = vrot.slane %v112, 4
    %v114 = vmax.f32 %v112, %v113
    %v115 = vrot.slane %v114, 2
    %v116 = vmax.f32 %v114, %v115
    %v117 = vrot.slane %v116, 1
    %v118 = vmax.f32 %v116, %v117
    %v119 = vsel %vm62, %v54, 0.0
    %v120 = vrot.slane %v119, 4
    %v121 = vadd.f32 %v119, %v120
    %v122 = vrot.slane %v121, 2
    %v123 = vadd.f32 %v121, %v122
    %v124 = vrot.slane %v123, 1
    %v125 = vadd.f32 %v123, %v124
    %v126 = vsel %vm62, %v55, 0.0
    %v127 = vrot.slane %v126, 4
    %v128 = vadd.f32 %v126, %v127
    %v129 = vrot.slane %v128, 2
    %v130 = vadd.f32 %v128, %v129
    %v131 = vrot.slane %v130, 1
    %v132 = vadd.f32 %v130, %v131
    %v133 = vsel %vm62, %v56, 0.0
    %v134 = vrot.slane %v133, 4
    %v135 = vadd.f32 %v133, %v134
    %v136 = vrot.slane %v135, 2
    %v137 = vadd.f32 %v135, %v136
    %v138 = vrot.slane %v137, 1
    %v139 = vadd.f32 %v137, %v138
    %v140 = vsel %vm62, %v57, 0.0
    %v141 = vrot.slane %v140, 4
    %v142 = vadd.f32 %v140, %v141
    %v143 = vrot.slane %v142, 2
    %v144 = vadd.f32 %v142, %v143
    %v145 = vrot.slane %v144, 1
    %v146 = vadd.f32 %v144, %v145
    %v147 = vsel %vm62, %v58, 0.0
    %v148 = vrot.slane %v147, 4
    %v149 = vadd.f32 %v147, %v148
    %v150 = vrot.slane %v149, 2
    %v151 = vadd.f32 %v149, %v150
    %v152 = vrot.slane %v151, 1
    %v153 = vadd.f32 %v151, %v152
    %v154 = vsel %vm62, %v59, 0.0
    %v155 = vrot.slane %v154, 4
    %v156 = vadd.f32 %v154, %v155
    %v157 = vrot.slane %v156, 2
    %v158 = vadd.f32 %v156, %v157
    %v159 = vrot.slane %v158, 1
    %v160 = vadd.f32 %v158, %v159
    %v161 = vsel %vm62, %v60, 0.0
    %v162 = vrot.slane %v161, 4
    %v163 = vadd.f32 %v161, %v162
    %v164 = vrot.slane %v163, 2
    %v165 = vadd.f32 %v163, %v164
    %v166 = vrot.slane %v165, 1
    %v167 = vadd.f32 %v165, %v166
    %v168 = vsel %vm62, %v61, 0.0
    %v169 = vrot.slane %v168, 4
    %v170 = vadd.f32 %v168, %v169
    %v171 = vrot.slane %v170, 2
    %v172 = vadd.f32 %v170, %v171
    %v173 = vrot.slane %v172, 1
    %v174 = vadd.f32 %v172, %v173
    %v175 = vmul.f32 %v125, 0.125
    %v176 = vmul.f32 %v132, 0.125
    %v177 = vmul.f32 %v139, 0.125
    %v178 = vmul.f32 %v146, 0.125
    %v179 = vmul.f32 %v153, 0.125
    %v180 = vmul.f32 %v160, 0.125
    %v181 = vmul.f32 %v167, 0.125
    %v182 = vmul.f32 %v174, 0.125
    %v183 = vld [vmem:[%s1] sm:$0xff]
    %v184 = vld [vmem:[%s1 + $0x8] sm:$0xff]
    %v185 = vld [vmem:[%s2] sm:$0x1]
    %v187 = vlaneseq
    %v188 = vshrl.u32 %v187, 7
    %v189 = vsub.s32 0, %v188
    %v190 = vrot.slane %v185, %v189
    %v193 = vsel %vm62, %v54, 0
    %v196 = vsel %vm62, %v55, 0
    %v199 = vsel %vm62, %v56, 0
    %v202 = vsel %vm62, %v57, 0
    %v205 = vsel %vm62, %v58, 0
    %v208 = vsel %vm62, %v59, 0
    %v211 = vsel %vm62, %v60, 0
    %v214 = vsel %vm62, %v61, 0
    %216 = vmatprep.subr.mxu0 0.0
    %217 = vmatpush1.msra.mxu0 %v183
    %218 = vmatprep.subr.mxu0 0.0
    %219 = vmatpush1.msra.mxu0 %v184
    %220 = vmatprep.subr.mxu0 0.0
    %221 = vmatpush1.msra.mxu0 0.0
    %222 = vmatprep.subr.mxu0 0.0
    %223 = vmatpush1.msra.mxu0 0.0
    %224 = vmatprep.subr.mxu0 0.0
    %225 = vmatpush1.msra.mxu0 0.0
    %226 = vmatprep.subr.mxu0 0.0
    %227 = vmatpush1.msra.mxu0 0.0
    %228 = vmatprep.subr.mxu0 0.0
    %229 = vmatpush1.msra.mxu0 0.0
    %230 = vmatprep.subr.mxu0 0.0
    %231 = vmatpush1.msra.mxu0 0.0
    %232 = vmatprep.subr.mxu0 0.0
    %233 = vmatpush1.msra.mxu0 0.0
    %234 = vmatprep.subr.mxu0 0.0
    %235 = vmatpush1.msra.mxu0 0.0
    %236 = vmatprep.subr.mxu0 0.0
    %237 = vmatpush1.msra.mxu0 0.0
    %238 = vmatprep.subr.mxu0 0.0
    %239 = vmatpush1.msra.mxu0 0.0
    %240 = vmatprep.subr.mxu0 0.0
    %241 = vmatpush1.msra.mxu0 0.0
    %242 = vmatprep.subr.mxu0 0.0
    %243 = vmatpush1.msra.mxu0 0.0
    %244 = vmatprep.subr.mxu0 0.0
    %245 = vmatpush1.msra.mxu0 0.0
    %246 = vmatprep.subr.mxu0 0.0
    %247 = vmatpush1.msra.mxu0 0.0
    %248 = vmatprep.subr.mxu0 0.0
    %249 = vmatpush1.msra.mxu0 0.0
    %250 = vmatprep.subr.mxu0 0.0
    %251 = vmatpush1.msra.mxu0 0.0
    %252 = vmatprep.subr.mxu0 0.0
    %253 = vmatpush1.msra.mxu0 0.0
    %254 = vmatprep.subr.mxu0 0.0
    %255 = vmatpush1.msra.mxu0 0.0
    %256 = vmatprep.subr.mxu0 0.0
    %257 = vmatpush1.msra.mxu0 0.0
    %258 = vmatprep.subr.mxu0 0.0
    %259 = vmatpush1.msra.mxu0 0.0
    %260 = vmatprep.subr.mxu0 0.0
    %261 = vmatpush1.msra.mxu0 0.0
    %262 = vmatprep.subr.mxu0 0.0
    %263 = vmatpush1.msra.mxu0 0.0
    %264 = vmatprep.subr.mxu0 0.0
    %265 = vmatpush1.msra.mxu0 0.0
    %266 = vmatprep.subr.mxu0 0.0
    %267 = vmatpush1.msra.mxu0 0.0
    %268 = vmatprep.subr.mxu0 0.0
    %269 = vmatpush1.msra.mxu0 0.0
    %270 = vmatprep.subr.mxu0 0.0
    %271 = vmatpush1.msra.mxu0 0.0
    %272 = vmatprep.subr.mxu0 0.0
    %273 = vmatpush1.msra.mxu0 0.0
    %274 = vmatprep.subr.mxu0 0.0
    %275 = vmatpush1.msra.mxu0 0.0
    %276 = vmatprep.subr.mxu0 0.0
    %277 = vmatpush1.msra.mxu0 0.0
    %278 = vmatprep.subr.mxu0 0.0
    %279 = vmatpush1.msra.mxu0 0.0
    %280 = vmatprep.mubr.f32.mxu0 0.0
    %281 = vmatmul.mubr.f32.gmra.mrb[0].mxu0 %v193
    %v282 = vpop.f32.mrb[0].mxu0
    %v283 = vadd.f32 %v190, %v282
    %v284 = vpop.f32.mrb[0].mxu0
    %285 = vmatprep.mubr.f32.mxu0 0.0
    %286 = vmatmul.mubr.f32.gmra.mrb[0].mxu0 %v196
    %v287 = vpop.f32.mrb[0].mxu0
    %v288 = vadd.f32 %v190, %v287
    %v289 = vpop.f32.mrb[0].mxu0
    %290 = vmatprep.mubr.f32.mxu0 0.0
    %291 = vmatmul.mubr.f32.gmra.mrb[0].mxu0 %v199
    %v292 = vpop.f32.mrb[0].mxu0
    %v293 = vadd.f32 %v190, %v292
    %v294 = vpop.f32.mrb[0].mxu0
    %295 = vmatprep.mubr.f32.mxu0 0.0
    %296 = vmatmul.mubr.f32.gmra.mrb[0].mxu0 %v202
    %v297 = vpop.f32.mrb[0].mxu0
    %v298 = vadd.f32 %v190, %v297
    %v299 = vpop.f32.mrb[0].mxu0
    %300 = vmatprep.mubr.f32.mxu0 0.0
    %301 = vmatmul.mubr.f32.gmra.mrb[0].mxu0 %v205
    %v302 = vpop.f32.mrb[0].mxu0
    %v303 = vadd.f32 %v190, %v302
    %v304 = vpop.f32.mrb[0].mxu0
    %305 = vmatprep.mubr.f32.mxu0 0.0
    %306 = vmatmul.mubr.f32.gmra.mrb[0].mxu0 %v208
    %v307 = vpop.f32.mrb[0].mxu0
    %v308 = vadd.f32 %v190, %v307
    %v309 = vpop.f32.mrb[0].mxu0
    %310 = vmatprep.mubr.f32.mxu0 0.0
    %311 = vmatmul.mubr.f32.gmra.mrb[0].mxu0 %v211
    %v312 = vpop.f32.mrb[0].mxu0
    %v313 = vadd.f32 %v190, %v312
    %v314 = vpop.f32.mrb[0].mxu0
    %315 = vmatprep.mubr.f32.mxu0 0.0
    %316 = vmatmul.mubr.f32.gmra.mrb[0].mxu0 %v214
    %v317 = vpop.f32.mrb[0].mxu0
    %v318 = vadd.f32 %v190, %v317
    %v319 = vpop.f32.mrb[0].mxu0
    %320 = vdwg.mxu0
    %v321 = vmax.f32 %v283, 0.0
    %v322 = vmax.f32 %v288, 0.0
    %v323 = vmax.f32 %v293, 0.0
    %v324 = vmax.f32 %v298, 0.0
    %v325 = vmax.f32 %v303, 0.0
    %v326 = vmax.f32 %v308, 0.0
    %v327 = vmax.f32 %v313, 0.0
    %v328 = vmax.f32 %v318, 0.0
    %v329 = vld [vmem:[%s3] sm:$0x1]
    %v331 = vlaneseq
    %v332 = vshrl.u32 %v331, 7
    %v333 = vsub.s32 0, %v332
    %v334 = vrot.slane %v329, %v333
    %v336 = vmul.f32 %v321, %v334
    %v337 = vmul.f32 %v322, %v334
    %v338 = vmul.f32 %v323, %v334
    %v339 = vmul.f32 %v324, %v334
    %v340 = vmul.f32 %v325, %v334
    %v341 = vmul.f32 %v326, %v334
    %v342 = vmul.f32 %v327, %v334
    %v343 = vmul.f32 %v328, %v334
    %vm344 = vcmask 64512
    %v345 = vsel %vm344, %v336, 0.0
    %346 = vadd.xlane.f32.xlu0 %v345
    %v347 = vpop.xlane.xlu0 %346
    %v348 = vsel %vm344, %v337, 0.0
    %349 = vadd.xlane.f32.xlu0 %v348
    %v350 = vpop.xlane.xlu0 %349
    %v351 = vsel %vm344, %v338, 0.0
    %352 = vadd.xlane.f32.xlu0 %v351
    %v353 = vpop.xlane.xlu0 %352
    %v354 = vsel %vm344, %v339, 0.0
    %355 = vadd.xlane.f32.xlu0 %v354
    %v356 = vpop.xlane.xlu0 %355
    %v357 = vsel %vm344, %v340, 0.0
    %358 = vadd.xlane.f32.xlu0 %v357
    %v359 = vpop.xlane.xlu0 %358
    %v360 = vsel %vm344, %v341, 0.0
    %361 = vadd.xlane.f32.xlu0 %v360
    %v362 = vpop.xlane.xlu0 %361
    %v363 = vsel %vm344, %v342, 0.0
    %364 = vadd.xlane.f32.xlu0 %v363
    %v365 = vpop.xlane.xlu0 %364
    %v366 = vsel %vm344, %v343, 0.0
    %367 = vadd.xlane.f32.xlu0 %v366
    %v368 = vpop.xlane.xlu0 %367
    %s369 = sld [smem:[#allocation6]]
    %v370 = vstv %s369
    %v371 = vadd.f32 %v347, %v370
    %v372 = vadd.f32 %v350, %v370
    %v373 = vadd.f32 %v353, %v370
    %v374 = vadd.f32 %v356, %v370
    %v375 = vadd.f32 %v359, %v370
    %v376 = vadd.f32 %v362, %v370
    %v377 = vadd.f32 %v365, %v370
    %v378 = vadd.f32 %v368, %v370
    %v379 = vrot.slane %v371, 4
    %v380 = vmax.f32 %v371, %v379
    %v381 = vrot.slane %v380, 2
    %v382 = vmax.f32 %v380, %v381
    %v383 = vrot.slane %v382, 1
    %v384 = vmax.f32 %v382, %v383
    %v385 = vrot.slane %v372, 4
    %v386 = vmax.f32 %v372, %v385
    %v387 = vrot.slane %v386, 2
    %v388 = vmax.f32 %v386, %v387
    %v389 = vrot.slane %v388, 1
    %v390 = vmax.f32 %v388, %v389
    %v391 = vrot.slane %v373, 4
    %v392 = vmax.f32 %v373, %v391
    %v393 = vrot.slane %v392, 2
    %v394 = vmax.f32 %v392, %v393
    %v395 = vrot.slane %v394, 1
    %v396 = vmax.f32 %v394, %v395
    %v397 = vrot.slane %v374, 4
    %v398 = vmax.f32 %v374, %v397
    %v399 = vrot.slane %v398, 2
    %v400 = vmax.f32 %v398, %v399
    %v401 = vrot.slane %v400, 1
    %v402 = vmax.f32 %v400, %v401
    %v403 = vrot.slane %v375, 4
    %v404 = vmax.f32 %v375, %v403
    %v405 = vrot.slane %v404, 2
    %v406 = vmax.f32 %v404, %v405
    %v407 = vrot.slane %v406, 1
    %v408 = vmax.f32 %v406, %v407
    %v409 = vrot.slane %v376, 4
    %v410 = vmax.f32 %v376, %v409
    %v411 = vrot.slane %v410, 2
    %v412 = vmax.f32 %v410, %v411
    %v413 = vrot.slane %v412, 1
    %v414 = vmax.f32 %v412, %v413
    %v415 = vrot.slane %v377, 4
    %v416 = vmax.f32 %v377, %v415
    %v417 = vrot.slane %v416, 2
    %v418 = vmax.f32 %v416, %v417
    %v419 = vrot.slane %v418, 1
    %v420 = vmax.f32 %v418, %v419
    %v421 = vrot.slane %v378, 4
    %v422 = vmax.f32 %v378, %v421
    %v423 = vrot.slane %v422, 2
    %v424 = vmax.f32 %v422, %v423
    %v425 = vrot.slane %v424, 1
    %v426 = vmax.f32 %v424, %v425
    %v427 = vsub.f32 %v371, %v384
    %v428 = vsub.f32 %v372, %v390
    %v429 = vsub.f32 %v373, %v396
    %v430 = vsub.f32 %v374, %v402
    %v431 = vsub.f32 %v375, %v408
    %v432 = vsub.f32 %v376, %v414
    %v433 = vsub.f32 %v377, %v420
    %v434 = vsub.f32 %v378, %v426
    %v435 = vmul.f32 %v427, 1.442695
    %v436 = vpow.pop %v435
    %v437 = vmul.f32 %v428, 1.442695
    %v438 = vpow.pop %v437
    %v439 = vmul.f32 %v429, 1.442695
    %v440 = vpow.pop %v439
    %v441 = vmul.f32 %v430, 1.442695
    %v442 = vpow.pop %v441
    %v443 = vmul.f32 %v431, 1.442695
    %v444 = vpow.pop %v443
    %v445 = vmul.f32 %v432, 1.442695
    %v446 = vpow.pop %v445
    %v447 = vmul.f32 %v433, 1.442695
    %v448 = vpow.pop %v447
    %v449 = vmul.f32 %v434, 1.442695
    %v450 = vpow.pop %v449
    %v451 = vrot.slane %v436, 4
    %v452 = vadd.f32 %v436, %v451
    %v453 = vrot.slane %v452, 2
    %v454 = vadd.f32 %v452, %v453
    %v455 = vrot.slane %v454, 1
    %v456 = vadd.f32 %v454, %v455
    %v457 = vrot.slane %v438, 4
    %v458 = vadd.f32 %v438, %v457
    %v459 = vrot.slane %v458, 2
    %v460 = vadd.f32 %v458, %v459
    %v461 = vrot.slane %v460, 1
    %v462 = vadd.f32 %v460, %v461
    %v463 = vrot.slane %v440, 4
    %v464 = vadd.f32 %v440, %v463
    %v465 = vrot.slane %v464, 2
    %v466 = vadd.f32 %v464, %v465
    %v467 = vrot.slane %v466, 1
    %v468 = vadd.f32 %v466, %v467
    %v469 = vrot.slane %v442, 4
    %v470 = vadd.f32 %v442, %v469
    %v471 = vrot.slane %v470, 2
    %v472 = vadd.f32 %v470, %v471
    %v473 = vrot.slane %v472, 1
    %v474 = vadd.f32 %v472, %v473
    %v475 = vrot.slane %v444, 4
    %v476 = vadd.f32 %v444, %v475
    %v477 = vrot.slane %v476, 2
    %v478 = vadd.f32 %v476, %v477
    %v479 = vrot.slane %v478, 1
    %v480 = vadd.f32 %v478, %v479
    %v481 = vrot.slane %v446, 4
    %v482 = vadd.f32 %v446, %v481
    %v483 = vrot.slane %v482, 2
    %v484 = vadd.f32 %v482, %v483
    %v485 = vrot.slane %v484, 1
    %v486 = vadd.f32 %v484, %v485
    %v487 = vrot.slane %v448, 4
    %v488 = vadd.f32 %v448, %v487
    %v489 = vrot.slane %v488, 2
    %v490 = vadd.f32 %v488, %v489
    %v491 = vrot.slane %v490, 1
    %v492 = vadd.f32 %v490, %v491
    %v493 = vrot.slane %v450, 4
    %v494 = vadd.f32 %v450, %v493
    %v495 = vrot.slane %v494, 2
    %v496 = vadd.f32 %v494, %v495
    %v497 = vrot.slane %v496, 1
    %v498 = vadd.f32 %v496, %v497
    %v499 = vrcp.pop %v456
    %v500 = vrcp.pop %v462
    %v501 = vrcp.pop %v468
    %v502 = vrcp.pop %v474
    %v503 = vrcp.pop %v480
    %v504 = vrcp.pop %v486
    %v505 = vrcp.pop %v492
    %v506 = vrcp.pop %v498
    %v507 = vmul.f32 %v436, %v499
    %v508 = vmul.f32 %v438, %v500
    %v509 = vmul.f32 %v440, %v501
    %v510 = vmul.f32 %v442, %v502
    %v511 = vmul.f32 %v444, %v503
    %v512 = vmul.f32 %v446, %v504
    %v513 = vmul.f32 %v448, %v505
    %v514 = vmul.f32 %v450, %v506
    %v515 = vmul.f32 %v507, %v54
    %v516 = vmul.f32 %v508, %v55
    %v517 = vmul.f32 %v509, %v56
    %v518 = vmul.f32 %v510, %v57
    %v519 = vmul.f32 %v511, %v58
    %v520 = vmul.f32 %v512, %v59
    %v521 = vmul.f32 %v513, %v60
    %v522 = vmul.f32 %v514, %v61
    %v523 = vsel %vm62, %v515, 0.0
    %v524 = vrot.slane %v523, 4
    %v525 = vadd.f32 %v523, %v524
    %v526 = vrot.slane %v525, 2
    %v527 = vadd.f32 %v525, %v526
    %v528 = vrot.slane %v527, 1
    %v529 = vadd.f32 %v527, %v528
    %v530 = vsel %vm62, %v516, 0.0
    %v531 = vrot.slane %v530, 4
    %v532 = vadd.f32 %v530, %v531
    %v533 = vrot.slane %v532, 2
    %v534 = vadd.f32 %v532, %v533
    %v535 = vrot.slane %v534, 1
    %v536 = vadd.f32 %v534, %v535
    %v537 = vsel %vm62, %v517, 0.0
    %v538 = vrot.slane %v537, 4
    %v539 = vadd.f32 %v537, %v538
    %v540 = vrot.slane %v539, 2
    %v541 = vadd.f32 %v539, %v540
    %v542 = vrot.slane %v541, 1
    %v543 = vadd.f32 %v541, %v542
    %v544 = vsel %vm62, %v518, 0.0
    %v545 = vrot.slane %v544, 4
    %v546 = vadd.f32 %v544, %v545
    %v547 = vrot.slane %v546, 2
    %v548 = vadd.f32 %v546, %v547
    %v549 = vrot.slane %v548, 1
    %v550 = vadd.f32 %v548, %v549
    %v551 = vsel %vm62, %v519, 0.0
    %v552 = vrot.slane %v551, 4
    %v553 = vadd.f32 %v551, %v552
    %v554 = vrot.slane %v553, 2
    %v555 = vadd.f32 %v553, %v554
    %v556 = vrot.slane %v555, 1
    %v557 = vadd.f32 %v555, %v556
    %v558 = vsel %vm62, %v520, 0.0
    %v559 = vrot.slane %v558, 4
    %v560 = vadd.f32 %v558, %v559
    %v561 = vrot.slane %v560, 2
    %v562 = vadd.f32 %v560, %v561
    %v563 = vrot.slane %v562, 1
    %v564 = vadd.f32 %v562, %v563
    %v565 = vsel %vm62, %v521, 0.0
    %v566 = vrot.slane %v565, 4
    %v567 = vadd.f32 %v565, %v566
    %v568 = vrot.slane %v567, 2
    %v569 = vadd.f32 %v567, %v568
    %v570 = vrot.slane %v569, 1
    %v571 = vadd.f32 %v569, %v570
    %v572 = vsel %vm62, %v522, 0.0
    %v573 = vrot.slane %v572, 4
    %v574 = vadd.f32 %v572, %v573
    %v575 = vrot.slane %v574, 2
    %v576 = vadd.f32 %v574, %v575
    %v577 = vrot.slane %v576, 1
    %v578 = vadd.f32 %v576, %v577
    %s579 = sld [smem:[#allocation6 + $0x1]]
    %s580 = sld [smem:[#allocation6 + $0x2]]
    %s581 = sld [smem:[#allocation6 + $0x3]]
    %s582 = sld [smem:[#allocation6 + $0x4]]
    %s583 = sld [smem:[#allocation6 + $0x5]]
    %s584 = sld [smem:[#allocation6 + $0x6]]
    %v585 = vstv %s579
    %v586 = vmul.f32 %v585, %v69
    %v587 = vmul.f32 %v585, %v76
    %v588 = vmul.f32 %v585, %v83
    %v589 = vmul.f32 %v585, %v90
    %v590 = vmul.f32 %v585, %v97
    %v591 = vmul.f32 %v585, %v104
    %v592 = vmul.f32 %v585, %v111
    %v593 = vmul.f32 %v585, %v118
    %v594 = vstv %s580
    %v595 = vmul.f32 %v594, %v175
    %v596 = vmul.f32 %v594, %v176
    %v597 = vmul.f32 %v594, %v177
    %v598 = vmul.f32 %v594, %v178
    %v599 = vmul.f32 %v594, %v179
    %v600 = vmul.f32 %v594, %v180
    %v601 = vmul.f32 %v594, %v181
    %v602 = vmul.f32 %v594, %v182
    %v603 = vadd.f32 %v586, %v595
    %v604 = vadd.f32 %v587, %v596
    %v605 = vadd.f32 %v588, %v597
    %v606 = vadd.f32 %v589, %v598
    %v607 = vadd.f32 %v590, %v599
    %v608 = vadd.f32 %v591, %v600
    %v609 = vadd.f32 %v592, %v601
    %v610 = vadd.f32 %v593, %v602
    %v611 = vstv %s581
    %v612 = vmul.f32 %v611, %v529
    %v613 = vmul.f32 %v611, %v536
    %v614 = vmul.f32 %v611, %v543
    %v615 = vmul.f32 %v611, %v550
    %v616 = vmul.f32 %v611, %v557
    %v617 = vmul.f32 %v611, %v564
    %v618 = vmul.f32 %v611, %v571
    %v619 = vmul.f32 %v611, %v578
    %v620 = vadd.f32 %v603, %v612
    %v621 = vadd.f32 %v604, %v613
    %v622 = vadd.f32 %v605, %v614
    %v623 = vadd.f32 %v606, %v615
    %v624 = vadd.f32 %v607, %v616
    %v625 = vadd.f32 %v608, %v617
    %v626 = vadd.f32 %v609, %v618
    %v627 = vadd.f32 %v610, %v619
    %v628 = vstv %s582
    %v629 = vadd.f32 %v620, %v628
    %v630 = vadd.f32 %v621, %v628
    %v631 = vadd.f32 %v622, %v628
    %v632 = vadd.f32 %v623, %v628
    %v633 = vadd.f32 %v624, %v628
    %v634 = vadd.f32 %v625, %v628
    %v635 = vadd.f32 %v626, %v628
    %v636 = vadd.f32 %v627, %v628
    %v637 = vtanh.pop %v629
    %v638 = vtanh.pop %v630
    %v639 = vtanh.pop %v631
    %v640 = vtanh.pop %v632
    %v641 = vtanh.pop %v633
    %v642 = vtanh.pop %v634
    %v643 = vtanh.pop %v635
    %v644 = vtanh.pop %v636
    %v645 = vstv %s583
    %v646 = vmul.f32 %v645, %v637
    %v647 = vmul.f32 %v645, %v638
    %v648 = vmul.f32 %v645, %v639
    %v649 = vmul.f32 %v645, %v640
    %v650 = vmul.f32 %v645, %v641
    %v651 = vmul.f32 %v645, %v642
    %v652 = vmul.f32 %v645, %v643
    %v653 = vmul.f32 %v645, %v644
    %v654 = vstv %s584
    %v655 = vadd.f32 %v646, %v654
    %v656 = vadd.f32 %v647, %v654
    %v657 = vadd.f32 %v648, %v654
    %v658 = vadd.f32 %v649, %v654
    %v659 = vadd.f32 %v650, %v654
    %v660 = vadd.f32 %v651, %v654
    %v661 = vadd.f32 %v652, %v654
    %v662 = vadd.f32 %v653, %v654
    %vm671 = vcmask 1041409
    %v672 = vsel %vm671, %v656, %v655
    %vm673 = vcmask 1042434
    %v674 = vsel %vm673, %v657, %v672
    %vm675 = vcmask 1043459
    %v676 = vsel %vm675, %v658, %v674
    %vm677 = vcmask 1044484
    %v678 = vsel %vm677, %v659, %v676
    %vm679 = vcmask 1045509
    %v680 = vsel %vm679, %v660, %v678
    %vm681 = vcmask 1046534
    %v682 = vsel %vm681, %v661, %v680
    %vm683 = vcmask 1047559
    %v684 = vsel %vm683, %v662, %v682
    %v686 = vsel %vm62, %v684, -inf
    %687 = vmax.xlane.f32.xlu0 %v686
    %v688 = vpop.xlane.xlu0 %687
    %v690 = vrot.slane %v688, 1
    %v691 = vrot.slane %v688, 2
    %v692 = vrot.slane %v688, 3
    %v693 = vrot.slane %v688, 4
    %v694 = vrot.slane %v688, 5
    %v695 = vrot.slane %v688, 6
    %v696 = vrot.slane %v688, 7
    %v705 = vsub.f32 %v655, %v688
    %v706 = vsub.f32 %v656, %v690
    %v707 = vsub.f32 %v657, %v691
    %v708 = vsub.f32 %v658, %v692
    %v709 = vsub.f32 %v659, %v693
    %v710 = vsub.f32 %v660, %v694
    %v711 = vsub.f32 %v661, %v695
    %v712 = vsub.f32 %v662, %v696
    %v713 = vmul.f32 %v705, 1.442695
    %v714 = vpow.pop %v713
    %v715 = vmul.f32 %v706, 1.442695
    %v716 = vpow.pop %v715
    %v717 = vmul.f32 %v707, 1.442695
    %v718 = vpow.pop %v717
    %v719 = vmul.f32 %v708, 1.442695
    %v720 = vpow.pop %v719
    %v721 = vmul.f32 %v709, 1.442695
    %v722 = vpow.pop %v721
    %v723 = vmul.f32 %v710, 1.442695
    %v724 = vpow.pop %v723
    %v725 = vmul.f32 %v711, 1.442695
    %v726 = vpow.pop %v725
    %v727 = vmul.f32 %v712, 1.442695
    %v728 = vpow.pop %v727
    %v737 = vrot.slane %v716, 7
    %v738 = vsel %vm671, %v737, %v714
    %v739 = vrot.slane %v718, 6
    %v740 = vsel %vm673, %v739, %v738
    %v741 = vrot.slane %v720, 5
    %v742 = vsel %vm675, %v741, %v740
    %v743 = vrot.slane %v722, 4
    %v744 = vsel %vm677, %v743, %v742
    %v745 = vrot.slane %v724, 3
    %v746 = vsel %vm679, %v745, %v744
    %v747 = vrot.slane %v726, 2
    %v748 = vsel %vm681, %v747, %v746
    %v749 = vrot.slane %v728, 1
    %v750 = vsel %vm683, %v749, %v748
    %v752 = vsel %vm62, %v750, 0.0
    %753 = vadd.xlane.f32.xlu0 %v752
    %v754 = vpop.xlane.xlu0 %753
    %v756 = vrot.slane %v754, 1
    %v757 = vrot.slane %v754, 2
    %v758 = vrot.slane %v754, 3
    %v759 = vrot.slane %v754, 4
    %v760 = vrot.slane %v754, 5
    %v761 = vrot.slane %v754, 6
    %v762 = vrot.slane %v754, 7
    %v771 = vrcp.pop %v754
    %v772 = vmul.f32 %v714, %v771
    %v773 = vrcp.pop %v756
    %v774 = vmul.f32 %v716, %v773
    %v775 = vrcp.pop %v757
    %v776 = vmul.f32 %v718, %v775
    %v777 = vrcp.pop %v758
    %v778 = vmul.f32 %v720, %v777
    %v779 = vrcp.pop %v759
    %v780 = vmul.f32 %v722, %v779
    %v781 = vrcp.pop %v760
    %v782 = vmul.f32 %v724, %v781
    %v783 = vrcp.pop %v761
    %v784 = vmul.f32 %v726, %v783
    %v785 = vrcp.pop %v762
    %v786 = vmul.f32 %v728, %v785
    %v787 = vld [vmem:[%s5] sm:$0xff]
    %v788 = vld [vmem:[%s5 + $0x8] sm:$0xff]
    %v789 = vld [vmem:[%s6] sm:$0x1]
    %v791 = vlaneseq
    %v792 = vshrl.u32 %v791, 7
    %v793 = vsub.s32 0, %v792
    %v794 = vrot.slane %v789, %v793
    %v804 = vrot.slane %v774, 7
    %v805 = vsel %vm671, %v804, %v772
    %v806 = vrot.slane %v776, 6
    %v807 = vsel %vm673, %v806, %v805
    %v808 = vrot.slane %v778, 5
    %v809 = vsel %vm675, %v808, %v807
    %v810 = vrot.slane %v780, 4
    %v811 = vsel %vm677, %v810, %v809
    %v812 = vrot.slane %v782, 3
    %v813 = vsel %vm679, %v812, %v811
    %v814 = vrot.slane %v784, 2
    %v815 = vsel %vm681, %v814, %v813
    %v816 = vrot.slane %v786, 1
    %v817 = vsel %vm683, %v816, %v815
    %v818 = vsel %vm62, %v817, 0
    %820 = vmatprep.subr.mxu0 0.0
    %821 = vmatpush1.msra.mxu0 %v787
    %822 = vmatprep.subr.mxu0 0.0
    %823 = vmatpush1.msra.mxu0 %v788
    %824 = vmatprep.subr.mxu0 0.0
    %825 = vmatpush1.msra.mxu0 0.0
    %826 = vmatprep.subr.mxu0 0.0
    %827 = vmatpush1.msra.mxu0 0.0
    %828 = vmatprep.subr.mxu0 0.0
    %829 = vmatpush1.msra.mxu0 0.0
    %830 = vmatprep.subr.mxu0 0.0
    %831 = vmatpush1.msra.mxu0 0.0
    %832 = vmatprep.subr.mxu0 0.0
    %833 = vmatpush1.msra.mxu0 0.0
    %834 = vmatprep.subr.mxu0 0.0
    %835 = vmatpush1.msra.mxu0 0.0
    %836 = vmatprep.subr.mxu0 0.0
    %837 = vmatpush1.msra.mxu0 0.0
    %838 = vmatprep.subr.mxu0 0.0
    %839 = vmatpush1.msra.mxu0 0.0
    %840 = vmatprep.subr.mxu0 0.0
    %841 = vmatpush1.msra.mxu0 0.0
    %842 = vmatprep.subr.mxu0 0.0
    %843 = vmatpush1.msra.mxu0 0.0
    %844 = vmatprep.subr.mxu0 0.0
    %845 = vmatpush1.msra.mxu0 0.0
    %846 = vmatprep.subr.mxu0 0.0
    %847 = vmatpush1.msra.mxu0 0.0
    %848 = vmatprep.subr.mxu0 0.0
    %849 = vmatpush1.msra.mxu0 0.0
    %850 = vmatprep.subr.mxu0 0.0
    %851 = vmatpush1.msra.mxu0 0.0
    %852 = vmatprep.subr.mxu0 0.0
    %853 = vmatpush1.msra.mxu0 0.0
    %854 = vmatprep.subr.mxu0 0.0
    %855 = vmatpush1.msra.mxu0 0.0
    %856 = vmatprep.subr.mxu0 0.0
    %857 = vmatpush1.msra.mxu0 0.0
    %858 = vmatprep.subr.mxu0 0.0
    %859 = vmatpush1.msra.mxu0 0.0
    %860 = vmatprep.subr.mxu0 0.0
    %861 = vmatpush1.msra.mxu0 0.0
    %862 = vmatprep.subr.mxu0 0.0
    %863 = vmatpush1.msra.mxu0 0.0
    %864 = vmatprep.subr.mxu0 0.0
    %865 = vmatpush1.msra.mxu0 0.0
    %866 = vmatprep.subr.mxu0 0.0
    %867 = vmatpush1.msra.mxu0 0.0
    %868 = vmatprep.subr.mxu0 0.0
    %869 = vmatpush1.msra.mxu0 0.0
    %870 = vmatprep.subr.mxu0 0.0
    %871 = vmatpush1.msra.mxu0 0.0
    %872 = vmatprep.subr.mxu0 0.0
    %873 = vmatpush1.msra.mxu0 0.0
    %874 = vmatprep.subr.mxu0 0.0
    %875 = vmatpush1.msra.mxu0 0.0
    %876 = vmatprep.subr.mxu0 0.0
    %877 = vmatpush1.msra.mxu0 0.0
    %878 = vmatprep.subr.mxu0 0.0
    %879 = vmatpush1.msra.mxu0 0.0
    %880 = vmatprep.subr.mxu0 0.0
    %881 = vmatpush1.msra.mxu0 0.0
    %882 = vmatprep.subr.mxu0 0.0
    %883 = vmatpush1.msra.mxu0 0.0
    %884 = vmatprep.mubr.f32.mxu0 0.0
    %885 = vmatmul.mubr.f32.gmra.mrb[0].mxu0 %v818
    %v886 = vpop.f32.mrb[0].mxu0
    %v887 = vadd.f32 %v794, %v886
    %v888 = vpop.f32.mrb[0].mxu0
    %889 = vdwg.mxu0
    %890 = vst [vmem:[#allocation7] sm:$0xff] %v887
    // Predicated region
    $region38: #{tpu_custom_call.1} parent=1 // pred_check
      _
    $region39: #{tpu_custom_call.1} parent=1 // pred_check_branch
      %892 = sbr.rel (0) target = $region41
    $region40: #{tpu_custom_call.1} parent=1 // pred_region
      %s894 = ssub.s32 128, 128
      %895 = vsyncadd [#allocation4], %s894
      %s897 = sshll.u32 [#allocation7], 4
      %s898 = int_to_ptr.vmem [resolvable:$true] %s897
      %900 = dma.vmem_to_hbm [thread:$0]  %s898, 128, %s7, [#allocation4]
    $region41: #{tpu_custom_call.1} parent=1 // pred_fallthru
      _
    // Predicated region
    $region42: #{tpu_custom_call.1} parent=1 // pred_check
      _
    $region43: #{tpu_custom_call.1} parent=1 // pred_check_branch
      %902 = sbr.rel (0) target = $region45
    $region44: #{tpu_custom_call.1} parent=1 // pred_region
      %903 = dma.done [#allocation4], 128
    $region45: #{tpu_custom_call.1} parent=1 // pred_fallthru
      _
    %904 = vsyncpa [#allocation3], 1
    %905 = vsyncpa [#allocation4], 1
    %906 = vsyncpa [#allocation5], 1

// kernel: tpu_custom_call.1
$region0: #{tpu_custom_call.1}
  #allocation0 [shape = 'u32[]', space=smem, size = 0x4, offset = 0x4, fixed_abs, tag = 'smem constant byte address 0x4 - core index']
  #allocation1 [shape = 'u32[144,128]{1,0:T(1,128)}', space=vmem, size = 0x12000, scoped, tag = 'internal scratch']
  %s0 = inlined_call_operand.hbm [shape: f32[8,8,16], index: 0, kind: input, shape index: {}]
  %s1 = inlined_call_operand.vmem [shape: f32[16,8], index: 1, kind: input, shape index: {}]
  %s2 = inlined_call_operand.vmem [shape: f32[1,8], index: 2, kind: input, shape index: {}]
  %s3 = inlined_call_operand.vmem [shape: f32[1,8], index: 3, kind: input, shape index: {}]
  %s4 = inlined_call_operand.vmem [shape: f32[7], index: 4, kind: input, shape index: {}]
  %s5 = inlined_call_operand.vmem [shape: f32[16,128], index: 5, kind: input, shape index: {}]
  %s6 = inlined_call_operand.vmem [shape: f32[1,128], index: 6, kind: input, shape index: {}]
  %s7 = inlined_call_operand.hbm [shape: f32[8,128], index: 7, kind: output, shape index: {}]
  %s8 = sld [smem:[#allocation0]]
  $region46: #{tpu_custom_call.1} parent=0
    _
  %s10 = ssub.s32 1, %s8
  %s11 = scalar_select 0, %s10, %s8
  $region1: #{tpu_custom_call.1} parent=0
    #allocation2 [shape = 'u8[32768]{0}', space=vmem, size = 0x8000, scoped, tag = 'input window, operand 0, single buffered']
    #allocation3 [shape = 's32[1]{0}', space=sflag, size = 0x4, scoped, tag = 'scoped memory for tpu_custom_call.1']
    #allocation4 [shape = 's32[1]{0}', space=sflag, size = 0x4, scoped, tag = 'scoped memory for tpu_custom_call.1']
    #allocation5 [shape = 's32[1]{0}', space=sflag, size = 0x4, scoped, tag = 'scoped memory for tpu_custom_call.1']
    #allocation6 [shape = 'u8[512]{0}', space=smem, size = 0x200, scoped, tag = 'input window, operand 4, single buffered']
    #allocation7 [shape = 'u8[4096]{0}', space=vmem, size = 0x1000, scoped, tag = 'output window, operand 0, single buffered']
    %12 = vsyncpa [#allocation3], 0
    %13 = vsyncpa [#allocation5], 0
    %14 = vsyncpa [#allocation4], 0
    // Predicated region
    $region2: #{tpu_custom_call.1} parent=1 // pred_check
      _
    $region3: #{tpu_custom_call.1} parent=1 // pred_check_branch
      %16 = sbr.rel (0) target = $region5
    $region4: #{tpu_custom_call.1} parent=1 // pred_region
      %s18 = ssub.s32 1024, 1024
      %19 = vsyncadd [#allocation3], %s18
      %s20 = sshll.u32 [#allocation2], 4
      %s21 = int_to_ptr.vmem [resolvable:$true] %s20
      %26 = dma.hbm_to_vmem [thread:$0]  %s0, 1024, %s21, [#allocation3], 128, 128, 8
    $region5: #{tpu_custom_call.1} parent=1 // pred_fallthru
      _
    // Predicated region
    $region6: #{tpu_custom_call.1} parent=1 // pred_check
      _
    $region7: #{tpu_custom_call.1} parent=1 // pred_check_branch
      %28 = sbr.rel (0) target = $region9
    $region8: #{tpu_custom_call.1} parent=1 // pred_region
      _
    $region9: #{tpu_custom_call.1} parent=1 // pred_fallthru
      _
    // Predicated region
    $region10: #{tpu_custom_call.1} parent=1 // pred_check
      _
    $region11: #{tpu_custom_call.1} parent=1 // pred_check_branch
      %30 = sbr.rel (0) target = $region13
    $region12: #{tpu_custom_call.1} parent=1 // pred_region
      _
    $region13: #{tpu_custom_call.1} parent=1 // pred_fallthru
      _
    // Predicated region
    $region14: #{tpu_custom_call.1} parent=1 // pred_check
      _
    $region15: #{tpu_custom_call.1} parent=1 // pred_check_branch
      %32 = sbr.rel (0) target = $region17
    $region16: #{tpu_custom_call.1} parent=1 // pred_region
      _
    $region17: #{tpu_custom_call.1} parent=1 // pred_fallthru
      _
    // Predicated region
    $region18: #{tpu_custom_call.1} parent=1 // pred_check
      _
    $region19: #{tpu_custom_call.1} parent=1 // pred_check_branch
      %34 = sbr.rel (0) target = $region21
    $region20: #{tpu_custom_call.1} parent=1 // pred_region
      %s36 = ssub.s32 16, 16
      %37 = vsyncadd [#allocation5], %s36
      %s39 = sshll.u32 %s4, 4
      %s40 = int_to_ptr.vmem [resolvable:$true] %s39
      %42 = dma.vmem_to_smem %s40, 16, [#allocation6], [#allocation5]
    $region21: #{tpu_custom_call.1} parent=1 // pred_fallthru
      _
    // Predicated region
    $region22: #{tpu_custom_call.1} parent=1 // pred_check
      _
    $region23: #{tpu_custom_call.1} parent=1 // pred_check_branch
      %44 = sbr.rel (0) target = $region25
    $region24: #{tpu_custom_call.1} parent=1 // pred_region
      _
    $region25: #{tpu_custom_call.1} parent=1 // pred_fallthru
      _
    // Predicated region
    $region26: #{tpu_custom_call.1} parent=1 // pred_check
      _
    $region27: #{tpu_custom_call.1} parent=1 // pred_check_branch
      %46 = sbr.rel (0) target = $region29
    $region28: #{tpu_custom_call.1} parent=1 // pred_region
      _
    $region29: #{tpu_custom_call.1} parent=1 // pred_fallthru
      _
    // Predicated region
    $region30: #{tpu_custom_call.1} parent=1 // pred_check
      _
    $region31: #{tpu_custom_call.1} parent=1 // pred_check_branch
      %48 = sbr.rel (0) target = $region33
    $region32: #{tpu_custom_call.1} parent=1 // pred_region
      %49 = dma.done [#allocation3], 1024
    $region33: #{tpu_custom_call.1} parent=1 // pred_fallthru
      _
    // Predicated region
    $region34: #{tpu_custom_call.1} parent=1 // pred_check
      _
    $region35: #{tpu_custom_call.1} parent=1 // pred_check_branch
      %51 = sbr.rel (0) target = $region37
    $region36: #{tpu_custom_call.1} parent=1 // pred_region
      %52 = dma.done [#allocation5], 16
    $region37: #{tpu_custom_call.1} parent=1 // pred_fallthru
      _
    %53 = sfence
    %v54 = vld [vmem:[#allocation2] sm:$0xff]
    %v55 = vld [vmem:[#allocation2 + $0x8] sm:$0xff]
    %v56 = vld [vmem:[#allocation2 + $0x10] sm:$0xff]
    %v57 = vld [vmem:[#allocation2 + $0x18] sm:$0xff]
    %v58 = vld [vmem:[#allocation2 + $0x20] sm:$0xff]
    %v59 = vld [vmem:[#allocation2 + $0x28] sm:$0xff]
    %v60 = vld [vmem:[#allocation2 + $0x30] sm:$0xff]
    %v61 = vld [vmem:[#allocation2 + $0x38] sm:$0xff]
    %vm62 = vcmask 130048
    %v63 = vsel %vm62, %v54, -inf
    %v64 = vrot.slane %v63, 4
    %v65 = vmax.f32 %v63, %v64
    %v66 = vrot.slane %v65, 2
    %v67 = vmax.f32 %v65, %v66
    %v68 = vrot.slane %v67, 1
    %v69 = vmax.f32 %v67, %v68
    %v70 = vsel %vm62, %v55, -inf
    %v71 = vrot.slane %v70, 4
    %v72 = vmax.f32 %v70, %v71
    %v73 = vrot.slane %v72, 2
    %v74 = vmax.f32 %v72, %v73
    %v75 = vrot.slane %v74, 1
    %v76 = vmax.f32 %v74, %v75
    %v77 = vsel %vm62, %v56, -inf
    %v78 = vrot.slane %v77, 4
    %v79 = vmax.f32 %v77, %v78
    %v80 = vrot.slane %v79, 2
    %v81 = vmax.f32 %v79, %v80
    %v82 = vrot.slane %v81, 1
    %v83 = vmax.f32 %v81, %v82
    %v84 = vsel %vm62, %v57, -inf
    %v85 = vrot.slane %v84, 4
    %v86 = vmax.f32 %v84, %v85
    %v87 = vrot.slane %v86, 2
    %v88 = vmax.f32 %v86, %v87
    %v89 = vrot.slane %v88, 1
    %v90 = vmax.f32 %v88, %v89
    %v91 = vsel %vm62, %v58, -inf
    %v92 = vrot.slane %v91, 4
    %v93 = vmax.f32 %v91, %v92
    %v94 = vrot.slane %v93, 2
    %v95 = vmax.f32 %v93, %v94
    %v96 = vrot.slane %v95, 1
    %v97 = vmax.f32 %v95, %v96
    %v98 = vsel %vm62, %v59, -inf
    %v99 = vrot.slane %v98, 4
    %v100 = vmax.f32 %v98, %v99
    %v101 = vrot.slane %v100, 2
    %v102 = vmax.f32 %v100, %v101
    %v103 = vrot.slane %v102, 1
    %v104 = vmax.f32 %v102, %v103
    %v105 = vsel %vm62, %v60, -inf
    %v106 = vrot.slane %v105, 4
    %v107 = vmax.f32 %v105, %v106
    %v108 = vrot.slane %v107, 2
    %v109 = vmax.f32 %v107, %v108
    %v110 = vrot.slane %v109, 1
    %v111 = vmax.f32 %v109, %v110
    %v112 = vsel %vm62, %v61, -inf
    %v113 = vrot.slane %v112, 4
    %v114 = vmax.f32 %v112, %v113
    %v115 = vrot.slane %v114, 2
    %v116 = vmax.f32 %v114, %v115
    %v117 = vrot.slane %v116, 1
    %v118 = vmax.f32 %v116, %v117
    %v119 = vsel %vm62, %v54, 0.0
    %v120 = vrot.slane %v119, 4
    %v121 = vadd.f32 %v119, %v120
    %v122 = vrot.slane %v121, 2
    %v123 = vadd.f32 %v121, %v122
    %v124 = vrot.slane %v123, 1
    %v125 = vadd.f32 %v123, %v124
    %v126 = vsel %vm62, %v55, 0.0
    %v127 = vrot.slane %v126, 4
    %v128 = vadd.f32 %v126, %v127
    %v129 = vrot.slane %v128, 2
    %v130 = vadd.f32 %v128, %v129
    %v131 = vrot.slane %v130, 1
    %v132 = vadd.f32 %v130, %v131
    %v133 = vsel %vm62, %v56, 0.0
    %v134 = vrot.slane %v133, 4
    %v135 = vadd.f32 %v133, %v134
    %v136 = vrot.slane %v135, 2
    %v137 = vadd.f32 %v135, %v136
    %v138 = vrot.slane %v137, 1
    %v139 = vadd.f32 %v137, %v138
    %v140 = vsel %vm62, %v57, 0.0
    %v141 = vrot.slane %v140, 4
    %v142 = vadd.f32 %v140, %v141
    %v143 = vrot.slane %v142, 2
    %v144 = vadd.f32 %v142, %v143
    %v145 = vrot.slane %v144, 1
    %v146 = vadd.f32 %v144, %v145
    %v147 = vsel %vm62, %v58, 0.0
    %v148 = vrot.slane %v147, 4
    %v149 = vadd.f32 %v147, %v148
    %v150 = vrot.slane %v149, 2
    %v151 = vadd.f32 %v149, %v150
    %v152 = vrot.slane %v151, 1
    %v153 = vadd.f32 %v151, %v152
    %v154 = vsel %vm62, %v59, 0.0
    %v155 = vrot.slane %v154, 4
    %v156 = vadd.f32 %v154, %v155
    %v157 = vrot.slane %v156, 2
    %v158 = vadd.f32 %v156, %v157
    %v159 = vrot.slane %v158, 1
    %v160 = vadd.f32 %v158, %v159
    %v161 = vsel %vm62, %v60, 0.0
    %v162 = vrot.slane %v161, 4
    %v163 = vadd.f32 %v161, %v162
    %v164 = vrot.slane %v163, 2
    %v165 = vadd.f32 %v163, %v164
    %v166 = vrot.slane %v165, 1
    %v167 = vadd.f32 %v165, %v166
    %v168 = vsel %vm62, %v61, 0.0
    %v169 = vrot.slane %v168, 4
    %v170 = vadd.f32 %v168, %v169
    %v171 = vrot.slane %v170, 2
    %v172 = vadd.f32 %v170, %v171
    %v173 = vrot.slane %v172, 1
    %v174 = vadd.f32 %v172, %v173
    %v175 = vmul.f32 %v125, 0.125
    %v176 = vmul.f32 %v132, 0.125
    %v177 = vmul.f32 %v139, 0.125
    %v178 = vmul.f32 %v146, 0.125
    %v179 = vmul.f32 %v153, 0.125
    %v180 = vmul.f32 %v160, 0.125
    %v181 = vmul.f32 %v167, 0.125
    %v182 = vmul.f32 %v174, 0.125
    %v183 = vld [vmem:[%s1] sm:$0xff]
    %v184 = vld [vmem:[%s1 + $0x8] sm:$0xff]
    %v185 = vld [vmem:[%s2] sm:$0x1]
    %v187 = vlaneseq
    %v188 = vshrl.u32 %v187, 7
    %v189 = vsub.s32 0, %v188
    %v190 = vrot.slane %v185, %v189
    %v193 = vsel %vm62, %v54, 0
    %v196 = vsel %vm62, %v55, 0
    %v199 = vsel %vm62, %v56, 0
    %v202 = vsel %vm62, %v57, 0
    %v205 = vsel %vm62, %v58, 0
    %v208 = vsel %vm62, %v59, 0
    %v211 = vsel %vm62, %v60, 0
    %v214 = vsel %vm62, %v61, 0
    %216 = vmatprep.subr.mxu0 0.0
    %217 = vmatpush1.msra.mxu0 %v183
    %218 = vmatprep.subr.mxu0 0.0
    %219 = vmatpush1.msra.mxu0 %v184
    %220 = vmatprep.subr.mxu0 0.0
    %221 = vmatpush1.msra.mxu0 0.0
    %222 = vmatprep.subr.mxu0 0.0
    %223 = vmatpush1.msra.mxu0 0.0
    %224 = vmatprep.subr.mxu0 0.0
    %225 = vmatpush1.msra.mxu0 0.0
    %226 = vmatprep.subr.mxu0 0.0
    %227 = vmatpush1.msra.mxu0 0.0
    %228 = vmatprep.subr.mxu0 0.0
    %229 = vmatpush1.msra.mxu0 0.0
    %230 = vmatprep.subr.mxu0 0.0
    %231 = vmatpush1.msra.mxu0 0.0
    %232 = vmatprep.subr.mxu0 0.0
    %233 = vmatpush1.msra.mxu0 0.0
    %234 = vmatprep.subr.mxu0 0.0
    %235 = vmatpush1.msra.mxu0 0.0
    %236 = vmatprep.subr.mxu0 0.0
    %237 = vmatpush1.msra.mxu0 0.0
    %238 = vmatprep.subr.mxu0 0.0
    %239 = vmatpush1.msra.mxu0 0.0
    %240 = vmatprep.subr.mxu0 0.0
    %241 = vmatpush1.msra.mxu0 0.0
    %242 = vmatprep.subr.mxu0 0.0
    %243 = vmatpush1.msra.mxu0 0.0
    %244 = vmatprep.subr.mxu0 0.0
    %245 = vmatpush1.msra.mxu0 0.0
    %246 = vmatprep.subr.mxu0 0.0
    %247 = vmatpush1.msra.mxu0 0.0
    %248 = vmatprep.subr.mxu0 0.0
    %249 = vmatpush1.msra.mxu0 0.0
    %250 = vmatprep.subr.mxu0 0.0
    %251 = vmatpush1.msra.mxu0 0.0
    %252 = vmatprep.subr.mxu0 0.0
    %253 = vmatpush1.msra.mxu0 0.0
    %254 = vmatprep.subr.mxu0 0.0
    %255 = vmatpush1.msra.mxu0 0.0
    %256 = vmatprep.subr.mxu0 0.0
    %257 = vmatpush1.msra.mxu0 0.0
    %258 = vmatprep.subr.mxu0 0.0
    %259 = vmatpush1.msra.mxu0 0.0
    %260 = vmatprep.subr.mxu0 0.0
    %261 = vmatpush1.msra.mxu0 0.0
    %262 = vmatprep.subr.mxu0 0.0
    %263 = vmatpush1.msra.mxu0 0.0
    %264 = vmatprep.subr.mxu0 0.0
    %265 = vmatpush1.msra.mxu0 0.0
    %266 = vmatprep.subr.mxu0 0.0
    %267 = vmatpush1.msra.mxu0 0.0
    %268 = vmatprep.subr.mxu0 0.0
    %269 = vmatpush1.msra.mxu0 0.0
    %270 = vmatprep.subr.mxu0 0.0
    %271 = vmatpush1.msra.mxu0 0.0
    %272 = vmatprep.subr.mxu0 0.0
    %273 = vmatpush1.msra.mxu0 0.0
    %274 = vmatprep.subr.mxu0 0.0
    %275 = vmatpush1.msra.mxu0 0.0
    %276 = vmatprep.subr.mxu0 0.0
    %277 = vmatpush1.msra.mxu0 0.0
    %278 = vmatprep.subr.mxu0 0.0
    %279 = vmatpush1.msra.mxu0 0.0
    %280 = vmatprep.mubr.f32.mxu0 0.0
    %281 = vmatmul.mubr.f32.gmra.mrb[0].mxu0 %v193
    %v282 = vpop.f32.mrb[0].mxu0
    %v283 = vadd.f32 %v190, %v282
    %v284 = vpop.f32.mrb[0].mxu0
    %285 = vmatprep.mubr.f32.mxu0 0.0
    %286 = vmatmul.mubr.f32.gmra.mrb[0].mxu0 %v196
    %v287 = vpop.f32.mrb[0].mxu0
    %v288 = vadd.f32 %v190, %v287
    %v289 = vpop.f32.mrb[0].mxu0
    %290 = vmatprep.mubr.f32.mxu0 0.0
    %291 = vmatmul.mubr.f32.gmra.mrb[0].mxu0 %v199
    %v292 = vpop.f32.mrb[0].mxu0
    %v293 = vadd.f32 %v190, %v292
    %v294 = vpop.f32.mrb[0].mxu0
    %295 = vmatprep.mubr.f32.mxu0 0.0
    %296 = vmatmul.mubr.f32.gmra.mrb[0].mxu0 %v202
    %v297 = vpop.f32.mrb[0].mxu0
    %v298 = vadd.f32 %v190, %v297
    %v299 = vpop.f32.mrb[0].mxu0
    %300 = vmatprep.mubr.f32.mxu0 0.0
    %301 = vmatmul.mubr.f32.gmra.mrb[0].mxu0 %v205
    %v302 = vpop.f32.mrb[0].mxu0
    %v303 = vadd.f32 %v190, %v302
    %v304 = vpop.f32.mrb[0].mxu0
    %305 = vmatprep.mubr.f32.mxu0 0.0
    %306 = vmatmul.mubr.f32.gmra.mrb[0].mxu0 %v208
    %v307 = vpop.f32.mrb[0].mxu0
    %v308 = vadd.f32 %v190, %v307
    %v309 = vpop.f32.mrb[0].mxu0
    %310 = vmatprep.mubr.f32.mxu0 0.0
    %311 = vmatmul.mubr.f32.gmra.mrb[0].mxu0 %v211
    %v312 = vpop.f32.mrb[0].mxu0
    %v313 = vadd.f32 %v190, %v312
    %v314 = vpop.f32.mrb[0].mxu0
    %315 = vmatprep.mubr.f32.mxu0 0.0
    %316 = vmatmul.mubr.f32.gmra.mrb[0].mxu0 %v214
    %v317 = vpop.f32.mrb[0].mxu0
    %v318 = vadd.f32 %v190, %v317
    %v319 = vpop.f32.mrb[0].mxu0
    %320 = vdwg.mxu0
    %v321 = vmax.f32 %v283, 0.0
    %v322 = vmax.f32 %v288, 0.0
    %v323 = vmax.f32 %v293, 0.0
    %v324 = vmax.f32 %v298, 0.0
    %v325 = vmax.f32 %v303, 0.0
    %v326 = vmax.f32 %v308, 0.0
    %v327 = vmax.f32 %v313, 0.0
    %v328 = vmax.f32 %v318, 0.0
    %v329 = vld [vmem:[%s3] sm:$0x1]
    %v331 = vlaneseq
    %v332 = vshrl.u32 %v331, 7
    %v333 = vsub.s32 0, %v332
    %v334 = vrot.slane %v329, %v333
    %v336 = vmul.f32 %v321, %v334
    %v337 = vmul.f32 %v322, %v334
    %v338 = vmul.f32 %v323, %v334
    %v339 = vmul.f32 %v324, %v334
    %v340 = vmul.f32 %v325, %v334
    %v341 = vmul.f32 %v326, %v334
    %v342 = vmul.f32 %v327, %v334
    %v343 = vmul.f32 %v328, %v334
    %vm344 = vcmask 64512
    %v345 = vsel %vm344, %v336, 0.0
    %346 = vadd.xlane.f32.xlu0 %v345
    %v347 = vpop.xlane.xlu0 %346
    %v348 = vsel %vm344, %v337, 0.0
    %349 = vadd.xlane.f32.xlu0 %v348
    %v350 = vpop.xlane.xlu0 %349
    %v351 = vsel %vm344, %v338, 0.0
    %352 = vadd.xlane.f32.xlu0 %v351
    %v353 = vpop.xlane.xlu0 %352
    %v354 = vsel %vm344, %v339, 0.0
    %355 = vadd.xlane.f32.xlu0 %v354
    %v356 = vpop.xlane.xlu0 %355
    %v357 = vsel %vm344, %v340, 0.0
    %358 = vadd.xlane.f32.xlu0 %v357
    %v359 = vpop.xlane.xlu0 %358
    %v360 = vsel %vm344, %v341, 0.0
    %361 = vadd.xlane.f32.xlu0 %v360
    %v362 = vpop.xlane.xlu0 %361
    %v363 = vsel %vm344, %v342, 0.0
    %364 = vadd.xlane.f32.xlu0 %v363
    %v365 = vpop.xlane.xlu0 %364
    %v366 = vsel %vm344, %v343, 0.0
    %367 = vadd.xlane.f32.xlu0 %v366
    %v368 = vpop.xlane.xlu0 %367
    %s369 = sld [smem:[#allocation6]]
    %v370 = vstv %s369
    %v371 = vadd.f32 %v347, %v370
    %v372 = vadd.f32 %v350, %v370
    %v373 = vadd.f32 %v353, %v370
    %v374 = vadd.f32 %v356, %v370
    %v375 = vadd.f32 %v359, %v370
    %v376 = vadd.f32 %v362, %v370
    %v377 = vadd.f32 %v365, %v370
    %v378 = vadd.f32 %v368, %v370
    %v379 = vrot.slane %v371, 4
    %v380 = vmax.f32 %v371, %v379
    %v381 = vrot.slane %v380, 2
    %v382 = vmax.f32 %v380, %v381
    %v383 = vrot.slane %v382, 1
    %v384 = vmax.f32 %v382, %v383
    %v385 = vrot.slane %v372, 4
    %v386 = vmax.f32 %v372, %v385
    %v387 = vrot.slane %v386, 2
    %v388 = vmax.f32 %v386, %v387
    %v389 = vrot.slane %v388, 1
    %v390 = vmax.f32 %v388, %v389
    %v391 = vrot.slane %v373, 4
    %v392 = vmax.f32 %v373, %v391
    %v393 = vrot.slane %v392, 2
    %v394 = vmax.f32 %v392, %v393
    %v395 = vrot.slane %v394, 1
    %v396 = vmax.f32 %v394, %v395
    %v397 = vrot.slane %v374, 4
    %v398 = vmax.f32 %v374, %v397
    %v399 = vrot.slane %v398, 2
    %v400 = vmax.f32 %v398, %v399
    %v401 = vrot.slane %v400, 1
    %v402 = vmax.f32 %v400, %v401
    %v403 = vrot.slane %v375, 4
    %v404 = vmax.f32 %v375, %v403
    %v405 = vrot.slane %v404, 2
    %v406 = vmax.f32 %v404, %v405
    %v407 = vrot.slane %v406, 1
    %v408 = vmax.f32 %v406, %v407
    %v409 = vrot.slane %v376, 4
    %v410 = vmax.f32 %v376, %v409
    %v411 = vrot.slane %v410, 2
    %v412 = vmax.f32 %v410, %v411
    %v413 = vrot.slane %v412, 1
    %v414 = vmax.f32 %v412, %v413
    %v415 = vrot.slane %v377, 4
    %v416 = vmax.f32 %v377, %v415
    %v417 = vrot.slane %v416, 2
    %v418 = vmax.f32 %v416, %v417
    %v419 = vrot.slane %v418, 1
    %v420 = vmax.f32 %v418, %v419
    %v421 = vrot.slane %v378, 4
    %v422 = vmax.f32 %v378, %v421
    %v423 = vrot.slane %v422, 2
    %v424 = vmax.f32 %v422, %v423
    %v425 = vrot.slane %v424, 1
    %v426 = vmax.f32 %v424, %v425
    %v427 = vsub.f32 %v371, %v384
    %v428 = vsub.f32 %v372, %v390
    %v429 = vsub.f32 %v373, %v396
    %v430 = vsub.f32 %v374, %v402
    %v431 = vsub.f32 %v375, %v408
    %v432 = vsub.f32 %v376, %v414
    %v433 = vsub.f32 %v377, %v420
    %v434 = vsub.f32 %v378, %v426
    %v435 = vmul.f32 %v427, 1.442695
    %v436 = vpow.pop %v435
    %v437 = vmul.f32 %v428, 1.442695
    %v438 = vpow.pop %v437
    %v439 = vmul.f32 %v429, 1.442695
    %v440 = vpow.pop %v439
    %v441 = vmul.f32 %v430, 1.442695
    %v442 = vpow.pop %v441
    %v443 = vmul.f32 %v431, 1.442695
    %v444 = vpow.pop %v443
    %v445 = vmul.f32 %v432, 1.442695
    %v446 = vpow.pop %v445
    %v447 = vmul.f32 %v433, 1.442695
    %v448 = vpow.pop %v447
    %v449 = vmul.f32 %v434, 1.442695
    %v450 = vpow.pop %v449
    %v451 = vrot.slane %v436, 4
    %v452 = vadd.f32 %v436, %v451
    %v453 = vrot.slane %v452, 2
    %v454 = vadd.f32 %v452, %v453
    %v455 = vrot.slane %v454, 1
    %v456 = vadd.f32 %v454, %v455
    %v457 = vrot.slane %v438, 4
    %v458 = vadd.f32 %v438, %v457
    %v459 = vrot.slane %v458, 2
    %v460 = vadd.f32 %v458, %v459
    %v461 = vrot.slane %v460, 1
    %v462 = vadd.f32 %v460, %v461
    %v463 = vrot.slane %v440, 4
    %v464 = vadd.f32 %v440, %v463
    %v465 = vrot.slane %v464, 2
    %v466 = vadd.f32 %v464, %v465
    %v467 = vrot.slane %v466, 1
    %v468 = vadd.f32 %v466, %v467
    %v469 = vrot.slane %v442, 4
    %v470 = vadd.f32 %v442, %v469
    %v471 = vrot.slane %v470, 2
    %v472 = vadd.f32 %v470, %v471
    %v473 = vrot.slane %v472, 1
    %v474 = vadd.f32 %v472, %v473
    %v475 = vrot.slane %v444, 4
    %v476 = vadd.f32 %v444, %v475
    %v477 = vrot.slane %v476, 2
    %v478 = vadd.f32 %v476, %v477
    %v479 = vrot.slane %v478, 1
    %v480 = vadd.f32 %v478, %v479
    %v481 = vrot.slane %v446, 4
    %v482 = vadd.f32 %v446, %v481
    %v483 = vrot.slane %v482, 2
    %v484 = vadd.f32 %v482, %v483
    %v485 = vrot.slane %v484, 1
    %v486 = vadd.f32 %v484, %v485
    %v487 = vrot.slane %v448, 4
    %v488 = vadd.f32 %v448, %v487
    %v489 = vrot.slane %v488, 2
    %v490 = vadd.f32 %v488, %v489
    %v491 = vrot.slane %v490, 1
    %v492 = vadd.f32 %v490, %v491
    %v493 = vrot.slane %v450, 4
    %v494 = vadd.f32 %v450, %v493
    %v495 = vrot.slane %v494, 2
    %v496 = vadd.f32 %v494, %v495
    %v497 = vrot.slane %v496, 1
    %v498 = vadd.f32 %v496, %v497
    %v499 = vrcp.pop %v456
    %v500 = vrcp.pop %v462
    %v501 = vrcp.pop %v468
    %v502 = vrcp.pop %v474
    %v503 = vrcp.pop %v480
    %v504 = vrcp.pop %v486
    %v505 = vrcp.pop %v492
    %v506 = vrcp.pop %v498
    %v507 = vmul.f32 %v436, %v499
    %v508 = vmul.f32 %v438, %v500
    %v509 = vmul.f32 %v440, %v501
    %v510 = vmul.f32 %v442, %v502
    %v511 = vmul.f32 %v444, %v503
    %v512 = vmul.f32 %v446, %v504
    %v513 = vmul.f32 %v448, %v505
    %v514 = vmul.f32 %v450, %v506
    %v515 = vmul.f32 %v507, %v54
    %v516 = vmul.f32 %v508, %v55
    %v517 = vmul.f32 %v509, %v56
    %v518 = vmul.f32 %v510, %v57
    %v519 = vmul.f32 %v511, %v58
    %v520 = vmul.f32 %v512, %v59
    %v521 = vmul.f32 %v513, %v60
    %v522 = vmul.f32 %v514, %v61
    %v523 = vsel %vm62, %v515, 0.0
    %v524 = vrot.slane %v523, 4
    %v525 = vadd.f32 %v523, %v524
    %v526 = vrot.slane %v525, 2
    %v527 = vadd.f32 %v525, %v526
    %v528 = vrot.slane %v527, 1
    %v529 = vadd.f32 %v527, %v528
    %v530 = vsel %vm62, %v516, 0.0
    %v531 = vrot.slane %v530, 4
    %v532 = vadd.f32 %v530, %v531
    %v533 = vrot.slane %v532, 2
    %v534 = vadd.f32 %v532, %v533
    %v535 = vrot.slane %v534, 1
    %v536 = vadd.f32 %v534, %v535
    %v537 = vsel %vm62, %v517, 0.0
    %v538 = vrot.slane %v537, 4
    %v539 = vadd.f32 %v537, %v538
    %v540 = vrot.slane %v539, 2
    %v541 = vadd.f32 %v539, %v540
    %v542 = vrot.slane %v541, 1
    %v543 = vadd.f32 %v541, %v542
    %v544 = vsel %vm62, %v518, 0.0
    %v545 = vrot.slane %v544, 4
    %v546 = vadd.f32 %v544, %v545
    %v547 = vrot.slane %v546, 2
    %v548 = vadd.f32 %v546, %v547
    %v549 = vrot.slane %v548, 1
    %v550 = vadd.f32 %v548, %v549
    %v551 = vsel %vm62, %v519, 0.0
    %v552 = vrot.slane %v551, 4
    %v553 = vadd.f32 %v551, %v552
    %v554 = vrot.slane %v553, 2
    %v555 = vadd.f32 %v553, %v554
    %v556 = vrot.slane %v555, 1
    %v557 = vadd.f32 %v555, %v556
    %v558 = vsel %vm62, %v520, 0.0
    %v559 = vrot.slane %v558, 4
    %v560 = vadd.f32 %v558, %v559
    %v561 = vrot.slane %v560, 2
    %v562 = vadd.f32 %v560, %v561
    %v563 = vrot.slane %v562, 1
    %v564 = vadd.f32 %v562, %v563
    %v565 = vsel %vm62, %v521, 0.0
    %v566 = vrot.slane %v565, 4
    %v567 = vadd.f32 %v565, %v566
    %v568 = vrot.slane %v567, 2
    %v569 = vadd.f32 %v567, %v568
    %v570 = vrot.slane %v569, 1
    %v571 = vadd.f32 %v569, %v570
    %v572 = vsel %vm62, %v522, 0.0
    %v573 = vrot.slane %v572, 4
    %v574 = vadd.f32 %v572, %v573
    %v575 = vrot.slane %v574, 2
    %v576 = vadd.f32 %v574, %v575
    %v577 = vrot.slane %v576, 1
    %v578 = vadd.f32 %v576, %v577
    %s579 = sld [smem:[#allocation6 + $0x1]]
    %s580 = sld [smem:[#allocation6 + $0x2]]
    %s581 = sld [smem:[#allocation6 + $0x3]]
    %s582 = sld [smem:[#allocation6 + $0x4]]
    %s583 = sld [smem:[#allocation6 + $0x5]]
    %s584 = sld [smem:[#allocation6 + $0x6]]
    %v585 = vstv %s579
    %v586 = vmul.f32 %v585, %v69
    %v587 = vmul.f32 %v585, %v76
    %v588 = vmul.f32 %v585, %v83
    %v589 = vmul.f32 %v585, %v90
    %v590 = vmul.f32 %v585, %v97
    %v591 = vmul.f32 %v585, %v104
    %v592 = vmul.f32 %v585, %v111
    %v593 = vmul.f32 %v585, %v118
    %v594 = vstv %s580
    %v595 = vmul.f32 %v594, %v175
    %v596 = vmul.f32 %v594, %v176
    %v597 = vmul.f32 %v594, %v177
    %v598 = vmul.f32 %v594, %v178
    %v599 = vmul.f32 %v594, %v179
    %v600 = vmul.f32 %v594, %v180
    %v601 = vmul.f32 %v594, %v181
    %v602 = vmul.f32 %v594, %v182
    %v603 = vadd.f32 %v586, %v595
    %v604 = vadd.f32 %v587, %v596
    %v605 = vadd.f32 %v588, %v597
    %v606 = vadd.f32 %v589, %v598
    %v607 = vadd.f32 %v590, %v599
    %v608 = vadd.f32 %v591, %v600
    %v609 = vadd.f32 %v592, %v601
    %v610 = vadd.f32 %v593, %v602
    %v611 = vstv %s581
    %v612 = vmul.f32 %v611, %v529
    %v613 = vmul.f32 %v611, %v536
    %v614 = vmul.f32 %v611, %v543
    %v615 = vmul.f32 %v611, %v550
    %v616 = vmul.f32 %v611, %v557
    %v617 = vmul.f32 %v611, %v564
    %v618 = vmul.f32 %v611, %v571
    %v619 = vmul.f32 %v611, %v578
    %v620 = vadd.f32 %v603, %v612
    %v621 = vadd.f32 %v604, %v613
    %v622 = vadd.f32 %v605, %v614
    %v623 = vadd.f32 %v606, %v615
    %v624 = vadd.f32 %v607, %v616
    %v625 = vadd.f32 %v608, %v617
    %v626 = vadd.f32 %v609, %v618
    %v627 = vadd.f32 %v610, %v619
    %v628 = vstv %s582
    %v629 = vadd.f32 %v620, %v628
    %v630 = vadd.f32 %v621, %v628
    %v631 = vadd.f32 %v622, %v628
    %v632 = vadd.f32 %v623, %v628
    %v633 = vadd.f32 %v624, %v628
    %v634 = vadd.f32 %v625, %v628
    %v635 = vadd.f32 %v626, %v628
    %v636 = vadd.f32 %v627, %v628
    %v637 = vtanh.pop %v629
    %v638 = vtanh.pop %v630
    %v639 = vtanh.pop %v631
    %v640 = vtanh.pop %v632
    %v641 = vtanh.pop %v633
    %v642 = vtanh.pop %v634
    %v643 = vtanh.pop %v635
    %v644 = vtanh.pop %v636
    %v645 = vstv %s583
    %v646 = vmul.f32 %v645, %v637
    %v647 = vmul.f32 %v645, %v638
    %v648 = vmul.f32 %v645, %v639
    %v649 = vmul.f32 %v645, %v640
    %v650 = vmul.f32 %v645, %v641
    %v651 = vmul.f32 %v645, %v642
    %v652 = vmul.f32 %v645, %v643
    %v653 = vmul.f32 %v645, %v644
    %v654 = vstv %s584
    %v655 = vadd.f32 %v646, %v654
    %v656 = vadd.f32 %v647, %v654
    %v657 = vadd.f32 %v648, %v654
    %v658 = vadd.f32 %v649, %v654
    %v659 = vadd.f32 %v650, %v654
    %v660 = vadd.f32 %v651, %v654
    %v661 = vadd.f32 %v652, %v654
    %v662 = vadd.f32 %v653, %v654
    %vm671 = vcmask 1041409
    %v672 = vsel %vm671, %v656, %v655
    %vm673 = vcmask 1042434
    %v674 = vsel %vm673, %v657, %v672
    %vm675 = vcmask 1043459
    %v676 = vsel %vm675, %v658, %v674
    %vm677 = vcmask 1044484
    %v678 = vsel %vm677, %v659, %v676
    %vm679 = vcmask 1045509
    %v680 = vsel %vm679, %v660, %v678
    %vm681 = vcmask 1046534
    %v682 = vsel %vm681, %v661, %v680
    %vm683 = vcmask 1047559
    %v684 = vsel %vm683, %v662, %v682
    %v686 = vsel %vm62, %v684, -inf
    %687 = vmax.xlane.f32.xlu0 %v686
    %v688 = vpop.xlane.xlu0 %687
    %v690 = vrot.slane %v688, 1
    %v691 = vrot.slane %v688, 2
    %v692 = vrot.slane %v688, 3
    %v693 = vrot.slane %v688, 4
    %v694 = vrot.slane %v688, 5
    %v695 = vrot.slane %v688, 6
    %v696 = vrot.slane %v688, 7
    %v705 = vsub.f32 %v655, %v688
    %v706 = vsub.f32 %v656, %v690
    %v707 = vsub.f32 %v657, %v691
    %v708 = vsub.f32 %v658, %v692
    %v709 = vsub.f32 %v659, %v693
    %v710 = vsub.f32 %v660, %v694
    %v711 = vsub.f32 %v661, %v695
    %v712 = vsub.f32 %v662, %v696
    %v713 = vmul.f32 %v705, 1.442695
    %v714 = vpow.pop %v713
    %v715 = vmul.f32 %v706, 1.442695
    %v716 = vpow.pop %v715
    %v717 = vmul.f32 %v707, 1.442695
    %v718 = vpow.pop %v717
    %v719 = vmul.f32 %v708, 1.442695
    %v720 = vpow.pop %v719
    %v721 = vmul.f32 %v709, 1.442695
    %v722 = vpow.pop %v721
    %v723 = vmul.f32 %v710, 1.442695
    %v724 = vpow.pop %v723
    %v725 = vmul.f32 %v711, 1.442695
    %v726 = vpow.pop %v725
    %v727 = vmul.f32 %v712, 1.442695
    %v728 = vpow.pop %v727
    %v737 = vrot.slane %v716, 7
    %v738 = vsel %vm671, %v737, %v714
    %v739 = vrot.slane %v718, 6
    %v740 = vsel %vm673, %v739, %v738
    %v741 = vrot.slane %v720, 5
    %v742 = vsel %vm675, %v741, %v740
    %v743 = vrot.slane %v722, 4
    %v744 = vsel %vm677, %v743, %v742
    %v745 = vrot.slane %v724, 3
    %v746 = vsel %vm679, %v745, %v744
    %v747 = vrot.slane %v726, 2
    %v748 = vsel %vm681, %v747, %v746
    %v749 = vrot.slane %v728, 1
    %v750 = vsel %vm683, %v749, %v748
    %v752 = vsel %vm62, %v750, 0.0
    %753 = vadd.xlane.f32.xlu0 %v752
    %v754 = vpop.xlane.xlu0 %753
    %v756 = vrot.slane %v754, 1
    %v757 = vrot.slane %v754, 2
    %v758 = vrot.slane %v754, 3
    %v759 = vrot.slane %v754, 4
    %v760 = vrot.slane %v754, 5
    %v761 = vrot.slane %v754, 6
    %v762 = vrot.slane %v754, 7
    %v771 = vrcp.pop %v754
    %v772 = vmul.f32 %v714, %v771
    %v773 = vrcp.pop %v756
    %v774 = vmul.f32 %v716, %v773
    %v775 = vrcp.pop %v757
    %v776 = vmul.f32 %v718, %v775
    %v777 = vrcp.pop %v758
    %v778 = vmul.f32 %v720, %v777
    %v779 = vrcp.pop %v759
    %v780 = vmul.f32 %v722, %v779
    %v781 = vrcp.pop %v760
    %v782 = vmul.f32 %v724, %v781
    %v783 = vrcp.pop %v761
    %v784 = vmul.f32 %v726, %v783
    %v785 = vrcp.pop %v762
    %v786 = vmul.f32 %v728, %v785
    %v787 = vld [vmem:[%s5] sm:$0xff]
    %v788 = vld [vmem:[%s5 + $0x8] sm:$0xff]
    %v789 = vld [vmem:[%s6] sm:$0x1]
    %v791 = vlaneseq
    %v792 = vshrl.u32 %v791, 7
    %v793 = vsub.s32 0, %v792
    %v794 = vrot.slane %v789, %v793
    %v804 = vrot.slane %v774, 7
    %v805 = vsel %vm671, %v804, %v772
    %v806 = vrot.slane %v776, 6
    %v807 = vsel %vm673, %v806, %v805
    %v808 = vrot.slane %v778, 5
    %v809 = vsel %vm675, %v808, %v807
    %v810 = vrot.slane %v780, 4
    %v811 = vsel %vm677, %v810, %v809
    %v812 = vrot.slane %v782, 3
    %v813 = vsel %vm679, %v812, %v811
    %v814 = vrot.slane %v784, 2
    %v815 = vsel %vm681, %v814, %v813
    %v816 = vrot.slane %v786, 1
    %v817 = vsel %vm683, %v816, %v815
    %v818 = vsel %vm62, %v817, 0
    %820 = vmatprep.subr.mxu0 0.0
    %821 = vmatpush1.msra.mxu0 %v787
    %822 = vmatprep.subr.mxu0 0.0
    %823 = vmatpush1.msra.mxu0 %v788
    %824 = vmatprep.subr.mxu0 0.0
    %825 = vmatpush1.msra.mxu0 0.0
    %826 = vmatprep.subr.mxu0 0.0
    %827 = vmatpush1.msra.mxu0 0.0
    %828 = vmatprep.subr.mxu0 0.0
    %829 = vmatpush1.msra.mxu0 0.0
    %830 = vmatprep.subr.mxu0 0.0
    %831 = vmatpush1.msra.mxu0 0.0
    %832 = vmatprep.subr.mxu0 0.0
    %833 = vmatpush1.msra.mxu0 0.0
    %834 = vmatprep.subr.mxu0 0.0
    %835 = vmatpush1.msra.mxu0 0.0
    %836 = vmatprep.subr.mxu0 0.0
    %837 = vmatpush1.msra.mxu0 0.0
    %838 = vmatprep.subr.mxu0 0.0
    %839 = vmatpush1.msra.mxu0 0.0
    %840 = vmatprep.subr.mxu0 0.0
    %841 = vmatpush1.msra.mxu0 0.0
    %842 = vmatprep.subr.mxu0 0.0
    %843 = vmatpush1.msra.mxu0 0.0
    %844 = vmatprep.subr.mxu0 0.0
    %845 = vmatpush1.msra.mxu0 0.0
    %846 = vmatprep.subr.mxu0 0.0
    %847 = vmatpush1.msra.mxu0 0.0
    %848 = vmatprep.subr.mxu0 0.0
    %849 = vmatpush1.msra.mxu0 0.0
    %850 = vmatprep.subr.mxu0 0.0
    %851 = vmatpush1.msra.mxu0 0.0
    %852 = vmatprep.subr.mxu0 0.0
    %853 = vmatpush1.msra.mxu0 0.0
    %854 = vmatprep.subr.mxu0 0.0
    %855 = vmatpush1.msra.mxu0 0.0
    %856 = vmatprep.subr.mxu0 0.0
    %857 = vmatpush1.msra.mxu0 0.0
    %858 = vmatprep.subr.mxu0 0.0
    %859 = vmatpush1.msra.mxu0 0.0
    %860 = vmatprep.subr.mxu0 0.0
    %861 = vmatpush1.msra.mxu0 0.0
    %862 = vmatprep.subr.mxu0 0.0
    %863 = vmatpush1.msra.mxu0 0.0
    %864 = vmatprep.subr.mxu0 0.0
    %865 = vmatpush1.msra.mxu0 0.0
    %866 = vmatprep.subr.mxu0 0.0
    %867 = vmatpush1.msra.mxu0 0.0
    %868 = vmatprep.subr.mxu0 0.0
    %869 = vmatpush1.msra.mxu0 0.0
    %870 = vmatprep.subr.mxu0 0.0
    %871 = vmatpush1.msra.mxu0 0.0
    %872 = vmatprep.subr.mxu0 0.0
    %873 = vmatpush1.msra.mxu0 0.0
    %874 = vmatprep.subr.mxu0 0.0
    %875 = vmatpush1.msra.mxu0 0.0
    %876 = vmatprep.subr.mxu0 0.0
    %877 = vmatpush1.msra.mxu0 0.0
    %878 = vmatprep.subr.mxu0 0.0
    %879 = vmatpush1.msra.mxu0 0.0
    %880 = vmatprep.subr.mxu0 0.0
    %881 = vmatpush1.msra.mxu0 0.0
    %882 = vmatprep.subr.mxu0 0.0
    %883 = vmatpush1.msra.mxu0 0.0
    %884 = vmatprep.mubr.f32.mxu0 0.0
    %885 = vmatmul.mubr.f32.gmra.mrb[0].mxu0 %v818
    %v886 = vpop.f32.mrb[0].mxu0
    %v887 = vadd.f32 %v794, %v886
    %v888 = vpop.f32.mrb[0].mxu0
    %889 = vdwg.mxu0
    %890 = vst [vmem:[#allocation7] sm:$0xff] %v887
    // Predicated region
    $region38: #{tpu_custom_call.1} parent=1 // pred_check
      _
    $region39: #{tpu_custom_call.1} parent=1 // pred_check_branch
      %892 = sbr.rel (0) target = $region41
    $region40: #{tpu_custom_call.1} parent=1 // pred_region
      %s894 = ssub.s32 128, 128
      %895 = vsyncadd [#allocation4], %s894
      %s897 = sshll.u32 [#allocation7], 4
      %s898 = int_to_ptr.vmem [resolvable:$true] %s897
      %900 = dma.vmem_to_hbm [thread:$0]  %s898, 128, %s7, [#allocation4]
    $region41: #{tpu_custom_call.1} parent=1 // pred_fallthru
      _
    // Predicated region
    $region42: #{tpu_custom_call.1} parent=1 // pred_check
      _
    $region43: #{tpu_custom_call.1} parent=1 // pred_check_branch
      %902 = sbr.rel (0) target = $region45
    $region44: #{tpu_custom_call.1} parent=1 // pred_region
      %903 = dma.done [#allocation4], 128
    $region45: #{tpu_custom_call.1} parent=1 // pred_fallthru
      _
    %904 = vsyncpa [#allocation3], 1
    %905 = vsyncpa [#allocation4], 1
    %906 = vsyncpa [#allocation5], 1

</llo_original>
